<compile_context>
chip_gen: v5e
topology: v5e:2x2
jax: 0.10.0
libtpu: 0.0.40
codegen_flags: <defaults>
</compile_context>

<pallas_src>
import functools
import math

import jax
import jax.numpy as jnp
from jax.experimental import pallas as pl
from jax.experimental.pallas import tpu as pltpu


# ----------------------------- small helpers (traced inside kernels) -------

def _layernorm(x, gamma, beta, eps=1e-12):
    mu = jnp.mean(x, axis=-1, keepdims=True)
    var = jnp.mean((x - mu) ** 2, axis=-1, keepdims=True)
    return (x - mu) * jax.lax.rsqrt(var + eps) * gamma + beta


def _gelu(x):
    # TODO(synk): HF BERT uses the exact erf-based GELU; a tanh approximation
    # is used here so the transcendental maps cleanly onto the TPU EUP.
    return 0.5 * x * (1.0 + jnp.tanh(0.7978845608028654 * (x + 0.044715 * x * x * x)))


# ----------------------------- Pallas kernels ------------------------------

def _encoder_stack_kernel(emb_ref, mb_ref, eg_ref, eb_ref,
                          wq_ref, bq_ref, wk_ref, bk_ref, wv_ref, bv_ref,
                          wo_ref, bo_ref, g1_ref, b1_ref,
                          wi_ref, bi_ref, wo2_ref, bo2_ref, g2_ref, b2_ref,
                          out_ref, *, num_heads):
    """One (batch-block, layer) grid step of the fused BERT encoder.

    grid = (B, L): the output block index is constant along L, so out_ref is
    the VMEM-resident hidden state carried across layers (accumulator
    pattern).  Layer l's weights arrive via the pipelined [L, ...] BlockSpecs.
    The embeddings LayerNorm is fused into the l == 0 step.
    """
    l = pl.program_id(1)

    # Seed the resident hidden state: embeddings LayerNorm at the first layer.
    @pl.when(l == 0)
    def _():
        x = emb_ref[0].astype(jnp.float32)                        # (S, H)
        out_ref[0] = _layernorm(x, eg_ref[...], eb_ref[...])

    h = out_ref[0]                                # (S, H), f32 residual stream
    mask_bias = mb_ref[0]                         # (1, S) additive mask (0 / -1e4)
    S, H = h.shape
    hd = H // num_heads
    scale = 1.0 / math.sqrt(hd)

    h_bf = h.astype(jnp.bfloat16)                 # bf16 operands for the MXU

    q = jnp.dot(h_bf, wq_ref[0], preferred_element_type=jnp.float32) + bq_ref[0]
    k = jnp.dot(h_bf, wk_ref[0], preferred_element_type=jnp.float32) + bk_ref[0]
    v = jnp.dot(h_bf, wv_ref[0], preferred_element_type=jnp.float32) + bv_ref[0]

    # Batched multi-head attention: (num_heads, S, hd) everywhere; one batched
    # einsum per contraction instead of a per-head Python loop + concatenate.
    qh = (q * scale).reshape(S, num_heads, hd).transpose(1, 0, 2)
    kh = k.reshape(S, num_heads, hd).transpose(1, 0, 2)
    vh = v.reshape(S, num_heads, hd).transpose(1, 0, 2)

    scores = jnp.einsum('hqd,hkd->hqk',
                        qh.astype(jnp.bfloat16), kh.astype(jnp.bfloat16),
                        preferred_element_type=jnp.float32)       # (nh, S, S)
    scores = scores + mask_bias                                   # bcast over heads/rows
    scores = scores - jnp.max(scores, axis=-1, keepdims=True)
    p = jnp.exp(scores)
    p = p * pl.reciprocal(jnp.sum(p, axis=-1, keepdims=True), approx=True)

    ctx = jnp.einsum('hqk,hkd->hqd',
                     p.astype(jnp.bfloat16), vh.astype(jnp.bfloat16),
                     preferred_element_type=jnp.float32)          # (nh, S, hd)
    ctx = ctx.transpose(1, 0, 2).reshape(S, H)                    # (S, H)

    attn_out = jnp.dot(ctx.astype(jnp.bfloat16), wo_ref[0],
                       preferred_element_type=jnp.float32) + bo_ref[0]
    h1 = _layernorm(h + attn_out, g1_ref[0], b1_ref[0])           # f32

    ffn = _gelu(jnp.dot(h1.astype(jnp.bfloat16), wi_ref[0],
                        preferred_element_type=jnp.float32) + bi_ref[0])
    ffn_out = jnp.dot(ffn.astype(jnp.bfloat16), wo2_ref[0],
                      preferred_element_type=jnp.float32) + bo2_ref[0]
    h2 = _layernorm(h1 + ffn_out, g2_ref[0], b2_ref[0])

    out_ref[0] = h2.astype(out_ref.dtype)


def _pooler_fc_kernel(cls_ref, wp_ref, bp_ref, wfc_ref, bfc_ref, out_ref):
    cls = cls_ref[...].astype(jnp.bfloat16)                           # (B, H)
    pooled = jnp.tanh(jnp.dot(cls, wp_ref[...],
                              preferred_element_type=jnp.float32) + bp_ref[...])
    # nn.Dropout(p=0.3) is the identity at inference time.
    logits = jnp.dot(pooled.astype(jnp.bfloat16), wfc_ref[...],
                     preferred_element_type=jnp.float32) + bfc_ref[...]
    out_ref[...] = logits.astype(out_ref.dtype)


# ----------------------------- wrappers (pallas_call glue) -----------------

def _encoder_vmem_bytes(S, H, I):
    """Rough per-call VMEM footprint (double-buffered bf16 weights + f32 act)."""
    w_bytes = (4 * H * H + 2 * H * I) * 2          # bf16 weights of one layer
    b_bytes = (8 * H + I) * 4                      # biases + LN params (f32)
    act_bytes = (8 * S * H + 4 * S * S) * 4        # working activations (f32)
    est = 2 * (w_bytes + b_bytes) + act_bytes + (2 << 20)
    return int(min(64 * 1024 * 1024, max(32 * 1024 * 1024, est)))


def encoder_stack(emb, mask_bias, params):
    """Runs emb-LayerNorm + all L transformer layers in one fused pallas_call."""
    B, S, H = emb.shape
    L = params["wq"].shape[0]
    I = params["wi"].shape[2]
    num_heads = params["num_heads"]
    kernel = functools.partial(_encoder_stack_kernel, num_heads=num_heads)

    hid = lambda b, l: (b, 0, 0)   # hidden state / mask: per-batch, resident over L
    cst = lambda b, l: (0, 0)      # constants (emb LN params)
    lw = lambda b, l: (l, 0, 0)    # stacked layer weights: streamed along L

    return pl.pallas_call(
        kernel,
        out_shape=jax.ShapeDtypeStruct((B, S, H), jnp.float32),
        grid=(B, L),
        in_specs=[
            pl.BlockSpec((1, S, H), hid),                               # embeddings
            pl.BlockSpec((1, 1, S), hid),                               # attn mask bias
            pl.BlockSpec((1, H), cst), pl.BlockSpec((1, H), cst),       # emb LN g/b
            pl.BlockSpec((1, H, H), lw), pl.BlockSpec((1, 1, H), lw),   # Wq, bq
            pl.BlockSpec((1, H, H), lw), pl.BlockSpec((1, 1, H), lw),   # Wk, bk
            pl.BlockSpec((1, H, H), lw), pl.BlockSpec((1, 1, H), lw),   # Wv, bv
            pl.BlockSpec((1, H, H), lw), pl.BlockSpec((1, 1, H), lw),   # Wo, bo
            pl.BlockSpec((1, 1, H), lw), pl.BlockSpec((1, 1, H), lw),   # LN1 g/b
            pl.BlockSpec((1, H, I), lw), pl.BlockSpec((1, 1, I), lw),   # Wi, bi
            pl.BlockSpec((1, I, H), lw), pl.BlockSpec((1, 1, H), lw),   # Wo2, bo2
            pl.BlockSpec((1, 1, H), lw), pl.BlockSpec((1, 1, H), lw),   # LN2 g/b
        ],
        out_specs=pl.BlockSpec((1, S, H), hid),
        compiler_params=pltpu.CompilerParams(
            dimension_semantics=("parallel", "arbitrary"),
            vmem_limit_bytes=_encoder_vmem_bytes(S, H, I)),
    )(emb, mask_bias, params["emb_ln_g"], params["emb_ln_b"],
      params["wq"], params["bq"], params["wk"], params["bk"],
      params["wv"], params["bv"], params["wo"], params["bo"],
      params["ln1_g"], params["ln1_b"],
      params["wi"], params["bi"], params["wo2"], params["bo2"],
      params["ln2_g"], params["ln2_b"])


def pooler_fc(cls, wp, bp, wfc, bfc):
    B, H = cls.shape
    C = wfc.shape[1]
    # Lane-dense output: pad the class dim to a multiple of 128 so logit
    # stores are unmasked vst; slice back to C outside the kernel.
    Cp = max(128, ((C + 127) // 128) * 128)
    wfc_p = jnp.pad(wfc, ((0, 0), (0, Cp - C)))
    bfc_p = jnp.pad(bfc, ((0, 0), (0, Cp - C)))
    logits_p = pl.pallas_call(
        _pooler_fc_kernel,
        out_shape=jax.ShapeDtypeStruct((B, Cp), jnp.float32),
        grid=(1,),
        in_specs=[pl.BlockSpec((B, H), lambda i: (0, 0)),
                  pl.BlockSpec((H, H), lambda i: (0, 0)),
                  pl.BlockSpec((1, H), lambda i: (0, 0)),
                  pl.BlockSpec((H, Cp), lambda i: (0, 0)),
                  pl.BlockSpec((1, Cp), lambda i: (0, 0))],
        out_specs=pl.BlockSpec((B, Cp), lambda i: (0, 0)),
    )(cls, wp, bp, wfc_p, bfc_p)
    return logits_p[:, :C]


# ----------------------------- model: params + forward ---------------------

def init_params(key, *, vocab, hidden, n_layers, n_heads, inter,
                max_pos, type_vocab, n_classes):
    keys = iter(jax.random.split(key, 16 + 8 * n_layers))

    def w(shape, dtype=jnp.float32):
        return (jax.random.normal(next(keys), shape, jnp.float32) * 0.02).astype(dtype)

    def wstack(shape):
        # per-layer weights stacked along L, stored bf16 (MXU-native operands)
        return (jax.random.normal(next(keys), (n_layers,) + shape, jnp.float32)
                * 0.02).astype(jnp.bfloat16)

    def zstack(shape):
        return jnp.zeros((n_layers,) + shape, jnp.float32)

    def ostack(shape):
        return jnp.ones((n_layers,) + shape, jnp.float32)

    params = {
        "num_heads": n_heads,
        "word_emb": w((vocab, hidden)),
        "pos_emb": w((max_pos, hidden)),
        "type_emb": w((type_vocab, hidden)),
        "emb_ln_g": jnp.ones((1, hidden), jnp.float32),
        "emb_ln_b": jnp.zeros((1, hidden), jnp.float32),
        # stacked encoder layer weights: [L, ...]
        "wq": wstack((hidden, hidden)), "bq": zstack((1, hidden)),
        "wk": wstack((hidden, hidden)), "bk": zstack((1, hidden)),
        "wv": wstack((hidden, hidden)), "bv": zstack((1, hidden)),
        "wo": wstack((hidden, hidden)), "bo": zstack((1, hidden)),
        "ln1_g": ostack((1, hidden)), "ln1_b": zstack((1, hidden)),
        "wi": wstack((hidden, inter)), "bi": zstack((1, inter)),
        "wo2": wstack((inter, hidden)), "bo2": zstack((1, hidden)),
        "ln2_g": ostack((1, hidden)), "ln2_b": zstack((1, hidden)),
        # pooler + classifier
        "pooler_w": w((hidden, hidden), jnp.bfloat16),
        "pooler_b": jnp.zeros((1, hidden), jnp.float32),
        "fc_w": w((hidden, n_classes), jnp.bfloat16),
        "fc_b": jnp.zeros((1, n_classes), jnp.float32),
    }
    return params


def bert_icd_forward(params, input_ids, attention_mask):
    """Equivalent of BertICDPredictor.forward(input_ids, attention_mask)."""
    B, S = input_ids.shape
    # --- embeddings (gathers are plain-JAX glue; LN is fused into encoder) ---
    # token_type_ids are assumed to be all zeros (matches the reference call).
    emb = (params["word_emb"][input_ids]
           + params["pos_emb"][:S][None, :, :]
           + params["type_emb"][0][None, None, :])

    # --- extended attention mask: (1 - m) * -10000, shaped (B, 1, S) ---
    mask_bias = ((1.0 - attention_mask.astype(jnp.float32)) * -10000.0).reshape(B, 1, S)

    # --- emb LayerNorm + all transformer layers in one fused, layer-resident kernel ---
    h = encoder_stack(emb, mask_bias, params)

    # --- pooled output = tanh(W_p @ h[:,0] + b_p); dropout (identity); fc ---
    cls = h[:, 0, :]
    logits = pooler_fc(cls, params["pooler_w"], params["pooler_b"],
                       params["fc_w"], params["fc_b"])
    return logits


# ----------------------------- demo ----------------------------------------

if __name__ == "__main__":
    key = jax.random.PRNGKey(0)
    kp, kid = jax.random.split(key)

    # small synthetic BERT config
    B, S = 2, 8
    VOCAB, HIDDEN, N_LAYERS, N_HEADS, INTER = 100, 32, 2, 4, 64
    MAX_POS, TYPE_VOCAB, N_CLASSES = 16, 2, 5

    params = init_params(kp, vocab=VOCAB, hidden=HIDDEN, n_layers=N_LAYERS,
                         n_heads=N_HEADS, inter=INTER, max_pos=MAX_POS,
                         type_vocab=TYPE_VOCAB, n_classes=N_CLASSES)

    input_ids = jax.random.randint(kid, (B, S), 0, VOCAB, dtype=jnp.int32)
    attention_mask = jnp.array([[1, 1, 1, 1, 1, 1, 1, 1],
                                [1, 1, 1, 1, 1, 1, 0, 0]], dtype=jnp.float32)

    logits = bert_icd_forward(params, input_ids, attention_mask)
    jax.block_until_ready(logits)
    assert logits.shape == (B, N_CLASSES) and logits.dtype == jnp.float32
    assert bool(jnp.all(jnp.isfinite(logits)))
    print("KERNEL_OK")
</pallas_src>

<mosaic_0001>
module attributes {stable_mosaic.version = 11 : i64} {
  func.func @_encoder_stack_kernel(%arg0: i32, %arg1: i32, %arg2: memref<1x8x32xf32, #tpu.memory_space<vmem>>, %arg3: memref<1x1x8xf32, #tpu.memory_space<vmem>>, %arg4: memref<1x32xf32, #tpu.memory_space<vmem>>, %arg5: memref<1x32xf32, #tpu.memory_space<vmem>>, %arg6: memref<1x32x32xbf16, #tpu.memory_space<vmem>>, %arg7: memref<1x1x32xf32, #tpu.memory_space<vmem>>, %arg8: memref<1x32x32xbf16, #tpu.memory_space<vmem>>, %arg9: memref<1x1x32xf32, #tpu.memory_space<vmem>>, %arg10: memref<1x32x32xbf16, #tpu.memory_space<vmem>>, %arg11: memref<1x1x32xf32, #tpu.memory_space<vmem>>, %arg12: memref<1x32x32xbf16, #tpu.memory_space<vmem>>, %arg13: memref<1x1x32xf32, #tpu.memory_space<vmem>>, %arg14: memref<1x1x32xf32, #tpu.memory_space<vmem>>, %arg15: memref<1x1x32xf32, #tpu.memory_space<vmem>>, %arg16: memref<1x32x64xbf16, #tpu.memory_space<vmem>>, %arg17: memref<1x1x64xf32, #tpu.memory_space<vmem>>, %arg18: memref<1x64x32xbf16, #tpu.memory_space<vmem>>, %arg19: memref<1x1x32xf32, #tpu.memory_space<vmem>>, %arg20: memref<1x1x32xf32, #tpu.memory_space<vmem>>, %arg21: memref<1x1x32xf32, #tpu.memory_space<vmem>>, %arg22: memref<1x8x32xf32, #tpu.memory_space<vmem>>) attributes {dimension_semantics = [#tpu.dimension_semantics<parallel>, #tpu.dimension_semantics<arbitrary>], iteration_bounds = array<i64: 2, 2>, scalar_prefetch = 0 : i64, scratch_operands = 0 : i64, tpu.core_type = #tpu.core_type<tc>, window_params = [{transform_indices = @transform_0, window_bounds = array<i64: 1, 8, 32>}, {transform_indices = @transform_1, window_bounds = array<i64: 1, 1, 8>}, {pipeline_mode = #tpu.pipeline_mode<synchronous>, transform_indices = @transform_2, window_bounds = array<i64: 1, 32>}, {pipeline_mode = #tpu.pipeline_mode<synchronous>, transform_indices = @transform_3, window_bounds = array<i64: 1, 32>}, {transform_indices = @transform_4, window_bounds = array<i64: 1, 32, 32>}, {transform_indices = @transform_5, window_bounds = array<i64: 1, 1, 32>}, {transform_indices = @transform_6, window_bounds = array<i64: 1, 32, 32>}, {transform_indices = @transform_7, window_bounds = array<i64: 1, 1, 32>}, {transform_indices = @transform_8, window_bounds = array<i64: 1, 32, 32>}, {transform_indices = @transform_9, window_bounds = array<i64: 1, 1, 32>}, {transform_indices = @transform_10, window_bounds = array<i64: 1, 32, 32>}, {transform_indices = @transform_11, window_bounds = array<i64: 1, 1, 32>}, {transform_indices = @transform_12, window_bounds = array<i64: 1, 1, 32>}, {transform_indices = @transform_13, window_bounds = array<i64: 1, 1, 32>}, {transform_indices = @transform_14, window_bounds = array<i64: 1, 32, 64>}, {transform_indices = @transform_15, window_bounds = array<i64: 1, 1, 64>}, {transform_indices = @transform_16, window_bounds = array<i64: 1, 64, 32>}, {transform_indices = @transform_17, window_bounds = array<i64: 1, 1, 32>}, {transform_indices = @transform_18, window_bounds = array<i64: 1, 1, 32>}, {transform_indices = @transform_19, window_bounds = array<i64: 1, 1, 32>}, {transform_indices = @transform_20, window_bounds = array<i64: 1, 8, 32>}]} {
    %c0_i32 = arith.constant 0 : i32
    %0 = arith.cmpi eq, %arg1, %c0_i32 : i32
    %1 = arith.extui %0 : i1 to i32
    %c0_i32_0 = arith.constant 0 : i32
    %2 = arith.cmpi ne, %1, %c0_i32_0 : i32
    scf.if %2 {
      %c0_81 = arith.constant 0 : index
      %c0_82 = arith.constant 0 : index
      %c0_83 = arith.constant 0 : index
      %152 = vector.load %arg2[%c0_81, %c0_82, %c0_83] : memref<1x8x32xf32, #tpu.memory_space<vmem>>, vector<1x8x32xf32>
      %153 = vector.shape_cast %152 : vector<1x8x32xf32> to vector<8x32xf32>
      %c0_84 = arith.constant 0 : index
      %c0_85 = arith.constant 0 : index
      %154 = vector.load %arg4[%c0_84, %c0_85] : memref<1x32xf32, #tpu.memory_space<vmem>>, vector<1x32xf32>
      %c0_86 = arith.constant 0 : index
      %c0_87 = arith.constant 0 : index
      %155 = vector.load %arg5[%c0_86, %c0_87] : memref<1x32xf32, #tpu.memory_space<vmem>>, vector<1x32xf32>
      %cst_88 = arith.constant dense<0.000000e+00> : vector<8xf32>
      %156 = vector.multi_reduction <add>, %153, %cst_88 [1] : vector<8x32xf32> to vector<8xf32>
      %157 = vector.shape_cast %156 : vector<8xf32> to vector<8x1xf32>
      %cst_89 = arith.constant 3.200000e+01 : f32
      %158 = vector.broadcast %cst_89 : f32 to vector<8x1xf32>
      %159 = arith.divf %157, %158 : vector<8x1xf32>
      %160 = vector.broadcast %159 : vector<8x1xf32> to vector<8x32xf32>
      %161 = arith.subf %153, %160 : vector<8x32xf32>
      %162 = arith.mulf %161, %161 : vector<8x32xf32>
      %cst_90 = arith.constant dense<0.000000e+00> : vector<8xf32>
      %163 = vector.multi_reduction <add>, %162, %cst_90 [1] : vector<8x32xf32> to vector<8xf32>
      %164 = vector.shape_cast %163 : vector<8xf32> to vector<8x1xf32>
      %cst_91 = arith.constant 3.200000e+01 : f32
      %165 = vector.broadcast %cst_91 : f32 to vector<8x1xf32>
      %166 = arith.divf %164, %165 : vector<8x1xf32>
      %167 = vector.broadcast %159 : vector<8x1xf32> to vector<8x32xf32>
      %168 = arith.subf %153, %167 : vector<8x32xf32>
      %cst_92 = arith.constant 9.99999996E-13 : f32
      %169 = vector.broadcast %cst_92 : f32 to vector<8x1xf32>
      %170 = arith.addf %166, %169 : vector<8x1xf32>
      %171 = math.rsqrt %170 : vector<8x1xf32>
      %172 = vector.broadcast %171 : vector<8x1xf32> to vector<8x32xf32>
      %173 = arith.mulf %168, %172 : vector<8x32xf32>
      %174 = vector.broadcast %154 : vector<1x32xf32> to vector<8x32xf32>
      %175 = arith.mulf %173, %174 : vector<8x32xf32>
      %176 = vector.broadcast %155 : vector<1x32xf32> to vector<8x32xf32>
      %177 = arith.addf %175, %176 : vector<8x32xf32>
      %c0_93 = arith.constant 0 : index
      %c0_94 = arith.constant 0 : index
      %c0_95 = arith.constant 0 : index
      %178 = vector.load %arg22[%c0_93, %c0_94, %c0_95] : memref<1x8x32xf32, #tpu.memory_space<vmem>>, vector<1x8x32xf32>
      %179 = vector.shape_cast %178 : vector<1x8x32xf32> to vector<8x32xf32>
      %180 = vector.shape_cast %177 : vector<8x32xf32> to vector<1x8x32xf32>
      tpu.vector_store %arg22[%c0_93, %c0_94, %c0_95], %180 {strides = array<i32>} : memref<1x8x32xf32, #tpu.memory_space<vmem>>, vector<1x8x32xf32>,
    } else {
    }
    %c0 = arith.constant 0 : index
    %c0_1 = arith.constant 0 : index
    %c0_2 = arith.constant 0 : index
    %3 = vector.load %arg22[%c0, %c0_1, %c0_2] : memref<1x8x32xf32, #tpu.memory_space<vmem>>, vector<1x8x32xf32>
    %4 = vector.shape_cast %3 : vector<1x8x32xf32> to vector<8x32xf32>
    %c0_3 = arith.constant 0 : index
    %c0_4 = arith.constant 0 : index
    %c0_5 = arith.constant 0 : index
    %5 = vector.load %arg3[%c0_3, %c0_4, %c0_5] : memref<1x1x8xf32, #tpu.memory_space<vmem>>, vector<1x1x8xf32>
    %6 = vector.shape_cast %5 : vector<1x1x8xf32> to vector<1x8xf32>
    %7 = arith.truncf %4 : vector<8x32xf32> to vector<8x32xbf16>
    %c0_6 = arith.constant 0 : index
    %c0_7 = arith.constant 0 : index
    %c0_8 = arith.constant 0 : index
    %8 = vector.load %arg6[%c0_6, %c0_7, %c0_8] : memref<1x32x32xbf16, #tpu.memory_space<vmem>>, vector<1x32x32xbf16>
    %9 = vector.shape_cast %8 : vector<1x32x32xbf16> to vector<32x32xbf16>
    %cst = arith.constant dense<0.000000e+00> : vector<8x32xf32>
    %10 = tpu.matmul %7, %9, %cst {dimension_numbers = #tpu.dot_dimension_numbers<[1], [0], [0], [1], [0, 0, 1, 1], [], []>} : vector<8x32xbf16>, vector<32x32xbf16>, vector<8x32xf32> -> vector<8x32xf32>
    %c0_9 = arith.constant 0 : index
    %c0_10 = arith.constant 0 : index
    %c0_11 = arith.constant 0 : index
    %11 = vector.load %arg7[%c0_9, %c0_10, %c0_11] : memref<1x1x32xf32, #tpu.memory_space<vmem>>, vector<1x1x32xf32>
    %12 = vector.shape_cast %11 : vector<1x1x32xf32> to vector<1x32xf32>
    %13 = vector.broadcast %12 : vector<1x32xf32> to vector<8x32xf32>
    %14 = arith.addf %10, %13 : vector<8x32xf32>
    %c0_12 = arith.constant 0 : index
    %c0_13 = arith.constant 0 : index
    %c0_14 = arith.constant 0 : index
    %15 = vector.load %arg8[%c0_12, %c0_13, %c0_14] : memref<1x32x32xbf16, #tpu.memory_space<vmem>>, vector<1x32x32xbf16>
    %16 = vector.shape_cast %15 : vector<1x32x32xbf16> to vector<32x32xbf16>
    %cst_15 = arith.constant dense<0.000000e+00> : vector<8x32xf32>
    %17 = tpu.matmul %7, %16, %cst_15 {dimension_numbers = #tpu.dot_dimension_numbers<[1], [0], [0], [1], [0, 0, 1, 1], [], []>} : vector<8x32xbf16>, vector<32x32xbf16>, vector<8x32xf32> -> vector<8x32xf32>
    %c0_16 = arith.constant 0 : index
    %c0_17 = arith.constant 0 : index
    %c0_18 = arith.constant 0 : index
    %18 = vector.load %arg9[%c0_16, %c0_17, %c0_18] : memref<1x1x32xf32, #tpu.memory_space<vmem>>, vector<1x1x32xf32>
    %19 = vector.shape_cast %18 : vector<1x1x32xf32> to vector<1x32xf32>
    %20 = vector.broadcast %19 : vector<1x32xf32> to vector<8x32xf32>
    %21 = arith.addf %17, %20 : vector<8x32xf32>
    %c0_19 = arith.constant 0 : index
    %c0_20 = arith.constant 0 : index
    %c0_21 = arith.constant 0 : index
    %22 = vector.load %arg10[%c0_19, %c0_20, %c0_21] : memref<1x32x32xbf16, #tpu.memory_space<vmem>>, vector<1x32x32xbf16>
    %23 = vector.shape_cast %22 : vector<1x32x32xbf16> to vector<32x32xbf16>
    %cst_22 = arith.constant dense<0.000000e+00> : vector<8x32xf32>
    %24 = tpu.matmul %7, %23, %cst_22 {dimension_numbers = #tpu.dot_dimension_numbers<[1], [0], [0], [1], [0, 0, 1, 1], [], []>} : vector<8x32xbf16>, vector<32x32xbf16>, vector<8x32xf32> -> vector<8x32xf32>
    %c0_23 = arith.constant 0 : index
    %c0_24 = arith.constant 0 : index
    %c0_25 = arith.constant 0 : index
    %25 = vector.load %arg11[%c0_23, %c0_24, %c0_25] : memref<1x1x32xf32, #tpu.memory_space<vmem>>, vector<1x1x32xf32>
    %26 = vector.shape_cast %25 : vector<1x1x32xf32> to vector<1x32xf32>
    %27 = vector.broadcast %26 : vector<1x32xf32> to vector<8x32xf32>
    %28 = arith.addf %24, %27 : vector<8x32xf32>
    %cst_26 = arith.constant 0.353553385 : f32
    %29 = vector.broadcast %cst_26 : f32 to vector<8x32xf32>
    %30 = arith.mulf %14, %29 : vector<8x32xf32>
    %31 = vector.shape_cast %30 : vector<8x32xf32> to vector<8x4x8xf32>
    %32 = tpu.transpose %31, [1, 0, 2] : vector<8x4x8xf32> -> vector<4x8x8xf32>
    %33 = vector.shape_cast %21 : vector<8x32xf32> to vector<8x4x8xf32>
    %34 = tpu.transpose %33, [1, 0, 2] : vector<8x4x8xf32> -> vector<4x8x8xf32>
    %35 = vector.shape_cast %28 : vector<8x32xf32> to vector<8x4x8xf32>
    %36 = tpu.transpose %35, [1, 0, 2] : vector<8x4x8xf32> -> vector<4x8x8xf32>
    %37 = arith.truncf %32 : vector<4x8x8xf32> to vector<4x8x8xbf16>
    %38 = arith.truncf %34 : vector<4x8x8xf32> to vector<4x8x8xbf16>
    "tpu.trace_start"() <{level = 10 : i32, message = "hqd,hkd->hqk"}> : () -> ()
    %cst_27 = arith.constant dense<0.000000e+00> : vector<4x8x8xf32>
    %39 = tpu.matmul %37, %38, %cst_27 {dimension_numbers = #tpu.dot_dimension_numbers<[2], [2], [1], [1], [0, 0, 0, 1, 1, 1], [0], [0]>} : vector<4x8x8xbf16>, vector<4x8x8xbf16>, vector<4x8x8xf32> -> vector<4x8x8xf32>
    "tpu.trace_stop"() : () -> ()
    %40 = vector.shape_cast %6 : vector<1x8xf32> to vector<1x1x8xf32>
    %41 = vector.broadcast %40 : vector<1x1x8xf32> to vector<4x8x8xf32>
    %42 = arith.addf %39, %41 : vector<4x8x8xf32>
    %cst_28 = arith.constant dense<0xFF800000> : vector<4x8xf32>
    %43 = vector.multi_reduction <maximumf>, %42, %cst_28 [2] : vector<4x8x8xf32> to vector<4x8xf32>
    %44 = vector.shape_cast %43 : vector<4x8xf32> to vector<4x8x1xf32>
    %45 = vector.broadcast %44 : vector<4x8x1xf32> to vector<4x8x8xf32>
    %46 = arith.subf %42, %45 : vector<4x8x8xf32>
    %47 = math.exp %46 : vector<4x8x8xf32>
    %cst_29 = arith.constant dense<0.000000e+00> : vector<4x8xf32>
    %48 = vector.multi_reduction <add>, %47, %cst_29 [2] : vector<4x8x8xf32> to vector<4x8xf32>
    %49 = vector.shape_cast %48 : vector<4x8xf32> to vector<4x8x1xf32>
    %50 = tpu.reciprocal %49 {approx = true} : vector<4x8x1xf32> -> vector<4x8x1xf32>
    %51 = vector.broadcast %50 : vector<4x8x1xf32> to vector<4x8x8xf32>
    %52 = arith.mulf %47, %51 : vector<4x8x8xf32>
    %53 = arith.truncf %52 : vector<4x8x8xf32> to vector<4x8x8xbf16>
    %54 = arith.truncf %36 : vector<4x8x8xf32> to vector<4x8x8xbf16>
    "tpu.trace_start"() <{level = 10 : i32, message = "hqk,hkd->hqd"}> : () -> ()
    %cst_30 = arith.constant dense<0.000000e+00> : vector<4x8x8xf32>
    %55 = tpu.matmul %53, %54, %cst_30 {dimension_numbers = #tpu.dot_dimension_numbers<[2], [1], [1], [2], [0, 0, 0, 1, 1, 2], [0], [0]>} : vector<4x8x8xbf16>, vector<4x8x8xbf16>, vector<4x8x8xf32> -> vector<4x8x8xf32>
    "tpu.trace_stop"() : () -> ()
    %56 = tpu.transpose %55, [1, 0, 2] : vector<4x8x8xf32> -> vector<8x4x8xf32>
    %57 = vector.shape_cast %56 : vector<8x4x8xf32> to vector<8x32xf32>
    %58 = arith.truncf %57 : vector<8x32xf32> to vector<8x32xbf16>
    %c0_31 = arith.constant 0 : index
    %c0_32 = arith.constant 0 : index
    %c0_33 = arith.constant 0 : index
    %59 = vector.load %arg12[%c0_31, %c0_32, %c0_33] : memref<1x32x32xbf16, #tpu.memory_space<vmem>>, vector<1x32x32xbf16>
    %60 = vector.shape_cast %59 : vector<1x32x32xbf16> to vector<32x32xbf16>
    %cst_34 = arith.constant dense<0.000000e+00> : vector<8x32xf32>
    %61 = tpu.matmul %58, %60, %cst_34 {dimension_numbers = #tpu.dot_dimension_numbers<[1], [0], [0], [1], [0, 0, 1, 1], [], []>} : vector<8x32xbf16>, vector<32x32xbf16>, vector<8x32xf32> -> vector<8x32xf32>
    %c0_35 = arith.constant 0 : index
    %c0_36 = arith.constant 0 : index
    %c0_37 = arith.constant 0 : index
    %62 = vector.load %arg13[%c0_35, %c0_36, %c0_37] : memref<1x1x32xf32, #tpu.memory_space<vmem>>, vector<1x1x32xf32>
    %63 = vector.shape_cast %62 : vector<1x1x32xf32> to vector<1x32xf32>
    %64 = vector.broadcast %63 : vector<1x32xf32> to vector<8x32xf32>
    %65 = arith.addf %61, %64 : vector<8x32xf32>
    %66 = arith.addf %4, %65 : vector<8x32xf32>
    %c0_38 = arith.constant 0 : index
    %c0_39 = arith.constant 0 : index
    %c0_40 = arith.constant 0 : index
    %67 = vector.load %arg14[%c0_38, %c0_39, %c0_40] : memref<1x1x32xf32, #tpu.memory_space<vmem>>, vector<1x1x32xf32>
    %68 = vector.shape_cast %67 : vector<1x1x32xf32> to vector<1x32xf32>
    %c0_41 = arith.constant 0 : index
    %c0_42 = arith.constant 0 : index
    %c0_43 = arith.constant 0 : index
    %69 = vector.load %arg15[%c0_41, %c0_42, %c0_43] : memref<1x1x32xf32, #tpu.memory_space<vmem>>, vector<1x1x32xf32>
    %70 = vector.shape_cast %69 : vector<1x1x32xf32> to vector<1x32xf32>
    %cst_44 = arith.constant dense<0.000000e+00> : vector<8xf32>
    %71 = vector.multi_reduction <add>, %66, %cst_44 [1] : vector<8x32xf32> to vector<8xf32>
    %72 = vector.shape_cast %71 : vector<8xf32> to vector<8x1xf32>
    %cst_45 = arith.constant 3.200000e+01 : f32
    %73 = vector.broadcast %cst_45 : f32 to vector<8x1xf32>
    %74 = arith.divf %72, %73 : vector<8x1xf32>
    %75 = vector.broadcast %74 : vector<8x1xf32> to vector<8x32xf32>
    %76 = arith.subf %66, %75 : vector<8x32xf32>
    %77 = arith.mulf %76, %76 : vector<8x32xf32>
    %cst_46 = arith.constant dense<0.000000e+00> : vector<8xf32>
    %78 = vector.multi_reduction <add>, %77, %cst_46 [1] : vector<8x32xf32> to vector<8xf32>
    %79 = vector.shape_cast %78 : vector<8xf32> to vector<8x1xf32>
    %cst_47 = arith.constant 3.200000e+01 : f32
    %80 = vector.broadcast %cst_47 : f32 to vector<8x1xf32>
    %81 = arith.divf %79, %80 : vector<8x1xf32>
    %82 = vector.broadcast %74 : vector<8x1xf32> to vector<8x32xf32>
    %83 = arith.subf %66, %82 : vector<8x32xf32>
    %cst_48 = arith.constant 9.99999996E-13 : f32
    %84 = vector.broadcast %cst_48 : f32 to vector<8x1xf32>
    %85 = arith.addf %81, %84 : vector<8x1xf32>
    %86 = math.rsqrt %85 : vector<8x1xf32>
    %87 = vector.broadcast %86 : vector<8x1xf32> to vector<8x32xf32>
    %88 = arith.mulf %83, %87 : vector<8x32xf32>
    %89 = vector.broadcast %68 : vector<1x32xf32> to vector<8x32xf32>
    %90 = arith.mulf %88, %89 : vector<8x32xf32>
    %91 = vector.broadcast %70 : vector<1x32xf32> to vector<8x32xf32>
    %92 = arith.addf %90, %91 : vector<8x32xf32>
    %93 = arith.truncf %92 : vector<8x32xf32> to vector<8x32xbf16>
    %c0_49 = arith.constant 0 : index
    %c0_50 = arith.constant 0 : index
    %c0_51 = arith.constant 0 : index
    %94 = vector.load %arg16[%c0_49, %c0_50, %c0_51] : memref<1x32x64xbf16, #tpu.memory_space<vmem>>, vector<1x32x64xbf16>
    %95 = vector.shape_cast %94 : vector<1x32x64xbf16> to vector<32x64xbf16>
    %cst_52 = arith.constant dense<0.000000e+00> : vector<8x64xf32>
    %96 = tpu.matmul %93, %95, %cst_52 {dimension_numbers = #tpu.dot_dimension_numbers<[1], [0], [0], [1], [0, 0, 1, 1], [], []>} : vector<8x32xbf16>, vector<32x64xbf16>, vector<8x64xf32> -> vector<8x64xf32>
    %c0_53 = arith.constant 0 : index
    %c0_54 = arith.constant 0 : index
    %c0_55 = arith.constant 0 : index
    %97 = vector.load %arg17[%c0_53, %c0_54, %c0_55] : memref<1x1x64xf32, #tpu.memory_space<vmem>>, vector<1x1x64xf32>
    %98 = vector.shape_cast %97 : vector<1x1x64xf32> to vector<1x64xf32>
    %99 = vector.broadcast %98 : vector<1x64xf32> to vector<8x64xf32>
    %100 = arith.addf %96, %99 : vector<8x64xf32>
    %cst_56 = arith.constant 5.000000e-01 : f32
    %101 = vector.broadcast %cst_56 : f32 to vector<8x64xf32>
    %102 = arith.mulf %101, %100 : vector<8x64xf32>
    %cst_57 = arith.constant 4.471500e-02 : f32
    %103 = vector.broadcast %cst_57 : f32 to vector<8x64xf32>
    %104 = arith.mulf %103, %100 : vector<8x64xf32>
    %105 = arith.mulf %104, %100 : vector<8x64xf32>
    %106 = arith.mulf %105, %100 : vector<8x64xf32>
    %107 = arith.addf %100, %106 : vector<8x64xf32>
    %cst_58 = arith.constant 0.797884583 : f32
    %108 = vector.broadcast %cst_58 : f32 to vector<8x64xf32>
    %109 = arith.mulf %108, %107 : vector<8x64xf32>
    %110 = math.tanh %109 : vector<8x64xf32>
    %cst_59 = arith.constant 1.000000e+00 : f32
    %111 = vector.broadcast %cst_59 : f32 to vector<8x64xf32>
    %112 = arith.addf %111, %110 : vector<8x64xf32>
    %113 = arith.mulf %102, %112 : vector<8x64xf32>
    %114 = arith.truncf %113 : vector<8x64xf32> to vector<8x64xbf16>
    %c0_60 = arith.constant 0 : index
    %c0_61 = arith.constant 0 : index
    %c0_62 = arith.constant 0 : index
    %115 = vector.load %arg18[%c0_60, %c0_61, %c0_62] : memref<1x64x32xbf16, #tpu.memory_space<vmem>>, vector<1x64x32xbf16>
    %116 = vector.shape_cast %115 : vector<1x64x32xbf16> to vector<64x32xbf16>
    %cst_63 = arith.constant dense<0.000000e+00> : vector<8x32xf32>
    %117 = tpu.matmul %114, %116, %cst_63 {dimension_numbers = #tpu.dot_dimension_numbers<[1], [0], [0], [1], [0, 0, 1, 1], [], []>} : vector<8x64xbf16>, vector<64x32xbf16>, vector<8x32xf32> -> vector<8x32xf32>
    %c0_64 = arith.constant 0 : index
    %c0_65 = arith.constant 0 : index
    %c0_66 = arith.constant 0 : index
    %118 = vector.load %arg19[%c0_64, %c0_65, %c0_66] : memref<1x1x32xf32, #tpu.memory_space<vmem>>, vector<1x1x32xf32>
    %119 = vector.shape_cast %118 : vector<1x1x32xf32> to vector<1x32xf32>
    %120 = vector.broadcast %119 : vector<1x32xf32> to vector<8x32xf32>
    %121 = arith.addf %117, %120 : vector<8x32xf32>
    %122 = arith.addf %92, %121 : vector<8x32xf32>
    %c0_67 = arith.constant 0 : index
    %c0_68 = arith.constant 0 : index
    %c0_69 = arith.constant 0 : index
    %123 = vector.load %arg20[%c0_67, %c0_68, %c0_69] : memref<1x1x32xf32, #tpu.memory_space<vmem>>, vector<1x1x32xf32>
    %124 = vector.shape_cast %123 : vector<1x1x32xf32> to vector<1x32xf32>
    %c0_70 = arith.constant 0 : index
    %c0_71 = arith.constant 0 : index
    %c0_72 = arith.constant 0 : index
    %125 = vector.load %arg21[%c0_70, %c0_71, %c0_72] : memref<1x1x32xf32, #tpu.memory_space<vmem>>, vector<1x1x32xf32>
    %126 = vector.shape_cast %125 : vector<1x1x32xf32> to vector<1x32xf32>
    %cst_73 = arith.constant dense<0.000000e+00> : vector<8xf32>
    %127 = vector.multi_reduction <add>, %122, %cst_73 [1] : vector<8x32xf32> to vector<8xf32>
    %128 = vector.shape_cast %127 : vector<8xf32> to vector<8x1xf32>
    %cst_74 = arith.constant 3.200000e+01 : f32
    %129 = vector.broadcast %cst_74 : f32 to vector<8x1xf32>
    %130 = arith.divf %128, %129 : vector<8x1xf32>
    %131 = vector.broadcast %130 : vector<8x1xf32> to vector<8x32xf32>
    %132 = arith.subf %122, %131 : vector<8x32xf32>
    %133 = arith.mulf %132, %132 : vector<8x32xf32>
    %cst_75 = arith.constant dense<0.000000e+00> : vector<8xf32>
    %134 = vector.multi_reduction <add>, %133, %cst_75 [1] : vector<8x32xf32> to vector<8xf32>
    %135 = vector.shape_cast %134 : vector<8xf32> to vector<8x1xf32>
    %cst_76 = arith.constant 3.200000e+01 : f32
    %136 = vector.broadcast %cst_76 : f32 to vector<8x1xf32>
    %137 = arith.divf %135, %136 : vector<8x1xf32>
    %138 = vector.broadcast %130 : vector<8x1xf32> to vector<8x32xf32>
    %139 = arith.subf %122, %138 : vector<8x32xf32>
    %cst_77 = arith.constant 9.99999996E-13 : f32
    %140 = vector.broadcast %cst_77 : f32 to vector<8x1xf32>
    %141 = arith.addf %137, %140 : vector<8x1xf32>
    %142 = math.rsqrt %141 : vector<8x1xf32>
    %143 = vector.broadcast %142 : vector<8x1xf32> to vector<8x32xf32>
    %144 = arith.mulf %139, %143 : vector<8x32xf32>
    %145 = vector.broadcast %124 : vector<1x32xf32> to vector<8x32xf32>
    %146 = arith.mulf %144, %145 : vector<8x32xf32>
    %147 = vector.broadcast %126 : vector<1x32xf32> to vector<8x32xf32>
    %148 = arith.addf %146, %147 : vector<8x32xf32>
    %c0_78 = arith.constant 0 : index
    %c0_79 = arith.constant 0 : index
    %c0_80 = arith.constant 0 : index
    %149 = vector.load %arg22[%c0_78, %c0_79, %c0_80] : memref<1x8x32xf32, #tpu.memory_space<vmem>>, vector<1x8x32xf32>
    %150 = vector.shape_cast %149 : vector<1x8x32xf32> to vector<8x32xf32>
    %151 = vector.shape_cast %148 : vector<8x32xf32> to vector<1x8x32xf32>
    tpu.vector_store %arg22[%c0_78, %c0_79, %c0_80], %151 {strides = array<i32>} : memref<1x8x32xf32, #tpu.memory_space<vmem>>, vector<1x8x32xf32>,
    return
  }
  func.func @transform_0(%arg0: i32, %arg1: i32) -> (i32, i32, i32) {
    %c0_i32 = arith.constant 0 : i32
    %c0_i32_0 = arith.constant 0 : i32
    %c0_i32_1 = arith.constant 0 : i32
    return %arg0, %c0_i32, %c0_i32_0 : i32, i32, i32
  }
  func.func @transform_1(%arg0: i32, %arg1: i32) -> (i32, i32, i32) {
    %c0_i32 = arith.constant 0 : i32
    %c0_i32_0 = arith.constant 0 : i32
    %c0_i32_1 = arith.constant 0 : i32
    return %arg0, %c0_i32, %c0_i32_0 : i32, i32, i32
  }
  func.func @transform_2(%arg0: i32, %arg1: i32) -> (i32, i32) {
    %c0_i32 = arith.constant 0 : i32
    %c0_i32_0 = arith.constant 0 : i32
    %c0_i32_1 = arith.constant 0 : i32
    return %c0_i32, %c0_i32_0 : i32, i32
  }
  func.func @transform_3(%arg0: i32, %arg1: i32) -> (i32, i32) {
    %c0_i32 = arith.constant 0 : i32
    %c0_i32_0 = arith.constant 0 : i32
    %c0_i32_1 = arith.constant 0 : i32
    return %c0_i32, %c0_i32_0 : i32, i32
  }
  func.func @transform_4(%arg0: i32, %arg1: i32) -> (i32, i32, i32) {
    %c0_i32 = arith.constant 0 : i32
    %c0_i32_0 = arith.constant 0 : i32
    %c0_i32_1 = arith.constant 0 : i32
    return %arg1, %c0_i32, %c0_i32_0 : i32, i32, i32
  }
  func.func @transform_5(%arg0: i32, %arg1: i32) -> (i32, i32, i32) {
    %c0_i32 = arith.constant 0 : i32
    %c0_i32_0 = arith.constant 0 : i32
    %c0_i32_1 = arith.constant 0 : i32
    return %arg1, %c0_i32, %c0_i32_0 : i32, i32, i32
  }
  func.func @transform_6(%arg0: i32, %arg1: i32) -> (i32, i32, i32) {
    %c0_i32 = arith.constant 0 : i32
    %c0_i32_0 = arith.constant 0 : i32
    %c0_i32_1 = arith.constant 0 : i32
    return %arg1, %c0_i32, %c0_i32_0 : i32, i32, i32
  }
  func.func @transform_7(%arg0: i32, %arg1: i32) -> (i32, i32, i32) {
    %c0_i32 = arith.constant 0 : i32
    %c0_i32_0 = arith.constant 0 : i32
    %c0_i32_1 = arith.constant 0 : i32
    return %arg1, %c0_i32, %c0_i32_0 : i32, i32, i32
  }
  func.func @transform_8(%arg0: i32, %arg1: i32) -> (i32, i32, i32) {
    %c0_i32 = arith.constant 0 : i32
    %c0_i32_0 = arith.constant 0 : i32
    %c0_i32_1 = arith.constant 0 : i32
    return %arg1, %c0_i32, %c0_i32_0 : i32, i32, i32
  }
  func.func @transform_9(%arg0: i32, %arg1: i32) -> (i32, i32, i32) {
    %c0_i32 = arith.constant 0 : i32
    %c0_i32_0 = arith.constant 0 : i32
    %c0_i32_1 = arith.constant 0 : i32
    return %arg1, %c0_i32, %c0_i32_0 : i32, i32, i32
  }
  func.func @transform_10(%arg0: i32, %arg1: i32) -> (i32, i32, i32) {
    %c0_i32 = arith.constant 0 : i32
    %c0_i32_0 = arith.constant 0 : i32
    %c0_i32_1 = arith.constant 0 : i32
    return %arg1, %c0_i32, %c0_i32_0 : i32, i32, i32
  }
  func.func @transform_11(%arg0: i32, %arg1: i32) -> (i32, i32, i32) {
    %c0_i32 = arith.constant 0 : i32
    %c0_i32_0 = arith.constant 0 : i32
    %c0_i32_1 = arith.constant 0 : i32
    return %arg1, %c0_i32, %c0_i32_0 : i32, i32, i32
  }
  func.func @transform_12(%arg0: i32, %arg1: i32) -> (i32, i32, i32) {
    %c0_i32 = arith.constant 0 : i32
    %c0_i32_0 = arith.constant 0 : i32
    %c0_i32_1 = arith.constant 0 : i32
    return %arg1, %c0_i32, %c0_i32_0 : i32, i32, i32
  }
  func.func @transform_13(%arg0: i32, %arg1: i32) -> (i32, i32, i32) {
    %c0_i32 = arith.constant 0 : i32
    %c0_i32_0 = arith.constant 0 : i32
    %c0_i32_1 = arith.constant 0 : i32
    return %arg1, %c0_i32, %c0_i32_0 : i32, i32, i32
  }
  func.func @transform_14(%arg0: i32, %arg1: i32) -> (i32, i32, i32) {
    %c0_i32 = arith.constant 0 : i32
    %c0_i32_0 = arith.constant 0 : i32
    %c0_i32_1 = arith.constant 0 : i32
    return %arg1, %c0_i32, %c0_i32_0 : i32, i32, i32
  }
  func.func @transform_15(%arg0: i32, %arg1: i32) -> (i32, i32, i32) {
    %c0_i32 = arith.constant 0 : i32
    %c0_i32_0 = arith.constant 0 : i32
    %c0_i32_1 = arith.constant 0 : i32
    return %arg1, %c0_i32, %c0_i32_0 : i32, i32, i32
  }
  func.func @transform_16(%arg0: i32, %arg1: i32) -> (i32, i32, i32) {
    %c0_i32 = arith.constant 0 : i32
    %c0_i32_0 = arith.constant 0 : i32
    %c0_i32_1 = arith.constant 0 : i32
    return %arg1, %c0_i32, %c0_i32_0 : i32, i32, i32
  }
  func.func @transform_17(%arg0: i32, %arg1: i32) -> (i32, i32, i32) {
    %c0_i32 = arith.constant 0 : i32
    %c0_i32_0 = arith.constant 0 : i32
    %c0_i32_1 = arith.constant 0 : i32
    return %arg1, %c0_i32, %c0_i32_0 : i32, i32, i32
  }
  func.func @transform_18(%arg0: i32, %arg1: i32) -> (i32, i32, i32) {
    %c0_i32 = arith.constant 0 : i32
    %c0_i32_0 = arith.constant 0 : i32
    %c0_i32_1 = arith.constant 0 : i32
    return %arg1, %c0_i32, %c0_i32_0 : i32, i32, i32
  }
  func.func @transform_19(%arg0: i32, %arg1: i32) -> (i32, i32, i32) {
    %c0_i32 = arith.constant 0 : i32
    %c0_i32_0 = arith.constant 0 : i32
    %c0_i32_1 = arith.constant 0 : i32
    return %arg1, %c0_i32, %c0_i32_0 : i32, i32, i32
  }
  func.func @transform_20(%arg0: i32, %arg1: i32) -> (i32, i32, i32) {
    %c0_i32 = arith.constant 0 : i32
    %c0_i32_0 = arith.constant 0 : i32
    %c0_i32_1 = arith.constant 0 : i32
    return %arg0, %c0_i32, %c0_i32_0 : i32, i32, i32
  }
}

</mosaic_0001>

<llo_original>
// kernel: tpu_custom_call.1
$region0: #{tpu_custom_call.1}
  #allocation0 [shape = 'u32[]', space=smem, size = 0x4, offset = 0x4, fixed_abs, tag = 'smem constant byte address 0x4 - core index']
  #allocation1 [shape = 'u32[72,128]{1,0:T(1,128)}', space=vmem, size = 0x9000, scoped, tag = 'internal scratch']
  %s0 = inlined_call_operand.hbm [shape: f32[2,8,32], index: 0, kind: input, shape index: {}]
  %s1 = inlined_call_operand.hbm [shape: f32[2,1,8], index: 1, kind: input, shape index: {}]
  %s2 = inlined_call_operand.vmem [shape: f32[1,32], index: 2, kind: input, shape index: {}]
  %s3 = inlined_call_operand.hbm [shape: f32[1,32], index: 3, kind: input, shape index: {}]
  %s4 = inlined_call_operand.vmem [shape: bf16[2,32,32], index: 4, kind: input, shape index: {}]
  %s5 = inlined_call_operand.vmem [shape: f32[2,1,32], index: 5, kind: input, shape index: {}]
  %s6 = inlined_call_operand.vmem [shape: bf16[2,32,32], index: 6, kind: input, shape index: {}]
  %s7 = inlined_call_operand.vmem [shape: f32[2,1,32], index: 7, kind: input, shape index: {}]
  %s8 = inlined_call_operand.vmem [shape: bf16[2,32,32], index: 8, kind: input, shape index: {}]
  %s9 = inlined_call_operand.vmem [shape: f32[2,1,32], index: 9, kind: input, shape index: {}]
  %s10 = inlined_call_operand.hbm [shape: bf16[2,32,32], index: 10, kind: input, shape index: {}]
  %s11 = inlined_call_operand.vmem [shape: f32[2,1,32], index: 11, kind: input, shape index: {}]
  %s12 = inlined_call_operand.vmem [shape: f32[2,1,32], index: 12, kind: input, shape index: {}]
  %s13 = inlined_call_operand.hbm [shape: f32[2,1,32], index: 13, kind: input, shape index: {}]
  %s14 = inlined_call_operand.hbm [shape: bf16[2,32,64], index: 14, kind: input, shape index: {}]
  %s15 = inlined_call_operand.vmem [shape: f32[2,1,64], index: 15, kind: input, shape index: {}]
  %s16 = inlined_call_operand.vmem [shape: bf16[2,64,32], index: 16, kind: input, shape index: {}]
  %s17 = inlined_call_operand.vmem [shape: f32[2,1,32], index: 17, kind: input, shape index: {}]
  %s18 = inlined_call_operand.vmem [shape: f32[2,1,32], index: 18, kind: input, shape index: {}]
  %s19 = inlined_call_operand.hbm [shape: f32[2,1,32], index: 19, kind: input, shape index: {}]
  %s20 = inlined_call_operand.hbm [shape: f32[2,8,32], index: 20, kind: output, shape index: {}]
  %s21 = sld [smem:[#allocation0]]
  $region145: #{tpu_custom_call.1} parent=0
    _
  %s23 = ssub.s32 1, %s21
  %s24 = scalar_select 0, %s23, %s21
  $region1: #{tpu_custom_call.1} parent=0
    #allocation2 [shape = 'u8[8192]{0}', space=vmem, size = 0x2000, scoped, tag = 'input window, operand 0']
    #allocation3 [shape = 's32[2]{0}', space=sflag, size = 0x8, scoped, tag = 'scoped memory for tpu_custom_call.1']
    #allocation4 [shape = 's32[2]{0}', space=sflag, size = 0x8, scoped, tag = 'scoped memory for tpu_custom_call.1']
    #allocation5 [shape = 'u8[1024]{0}', space=vmem, size = 0x400, scoped, tag = 'input window, operand 1']
    #allocation6 [shape = 's32[2]{0}', space=sflag, size = 0x8, scoped, tag = 'scoped memory for tpu_custom_call.1']
    #allocation7 [shape = 'u8[512]{0}', space=vmem, size = 0x400, scoped, tag = 'input window, operand 3, single buffered']
    #allocation8 [shape = 'u8[16384]{0}', space=vmem, size = 0x4000, scoped, tag = 'input window, operand 10']
    #allocation9 [shape = 's32[2]{0}', space=sflag, size = 0x8, scoped, tag = 'scoped memory for tpu_custom_call.1']
    #allocation10 [shape = 'u8[1024]{0}', space=vmem, size = 0x400, scoped, tag = 'input window, operand 13']
    #allocation11 [shape = 'u8[16384]{0}', space=vmem, size = 0x4000, scoped, tag = 'input window, operand 14']
    #allocation12 [shape = 's32[2]{0}', space=sflag, size = 0x8, scoped, tag = 'scoped memory for tpu_custom_call.1']
    #allocation13 [shape = 'u8[1024]{0}', space=vmem, size = 0x400, scoped, tag = 'input window, operand 19']
    #allocation14 [shape = 'u8[8192]{0}', space=vmem, size = 0x2000, scoped, tag = 'output window, operand 0']
    %25 = vsyncpa [#allocation3], 0
    %s26 = scalar_lea.sflag [#allocation3], 1
    %27 = vsyncpa %s26, 0
    %28 = vsyncpa [#allocation6], 0
    %s29 = scalar_lea.sflag [#allocation6], 1
    %30 = vsyncpa %s29, 0
    %31 = vsyncpa [#allocation9], 0
    %s32 = scalar_lea.sflag [#allocation9], 1
    %33 = vsyncpa %s32, 0
    %34 = vsyncpa [#allocation12], 0
    %s35 = scalar_lea.sflag [#allocation12], 1
    %36 = vsyncpa %s35, 0
    %37 = vsyncpa [#allocation4], 0
    %s38 = scalar_lea.sflag [#allocation4], 1
    %39 = vsyncpa %s38, 0
    loop: start=0, step=1, limit=6
    $region2: #{tpu_custom_call.1} parent=1 // loop_pre_header
      _
    $region3: #{tpu_custom_call.1} parent=1 // loop_header
      %s41 = sphi 0, %s45
      %p42 = scmp.ge.s32.totalorder %s41, 6
      %s48 = sphi 0, %s60
      %s49 = sphi 0, %s56
      %s50 = sphi 0, %s48
      %s51 = sphi 0, %s49
      %s52 = sphi 0, %s50
      %s53 = sphi 0, %s51
      %s63 = sphi 0, %s65
      %s66 = sphi 0, %s63
      %s67 = sphi 0, %s66
      %s83 = sphi 0, %s67
      %s89 = sphi 0, %s91
      %s92 = sphi 0, %s89
      %s93 = sphi 0, %s92
      %s109 = sphi 0, %s93
      %s113 = sphi 0, %s113
      %s115 = sphi 0, %s113
      %s116 = sphi 0, %s115
      %s130 = sphi 0, %s116
      %s134 = sphi 0, %s134
      %s136 = sphi 0, %s134
      %s137 = sphi 0, %s136
      %s151 = sphi 0, %s137
      %s157 = sphi 0, %s159
      %s160 = sphi 0, %s157
      %s161 = sphi 0, %s160
      %s177 = sphi 0, %s161
      %s183 = sphi 0, %s185
      %s186 = sphi 0, %s183
      %s187 = sphi 0, %s186
      %s203 = sphi 0, %s187
      %s209 = sphi 0, %s211
      %s212 = sphi 0, %s209
      %s213 = sphi 0, %s212
      %s229 = sphi 0, %s213
      %s235 = sphi 0, %s237
      %s238 = sphi 0, %s235
      %s239 = sphi 0, %s238
      %s255 = sphi 0, %s239
      %s261 = sphi 0, %s263
      %s264 = sphi 0, %s261
      %s265 = sphi 0, %s264
      %s281 = sphi 0, %s265
      %s287 = sphi 0, %s289
      %s290 = sphi 0, %s287
      %s291 = sphi 0, %s290
      %s307 = sphi 0, %s291
      %s313 = sphi 0, %s315
      %s316 = sphi 0, %s313
      %s317 = sphi 0, %s316
      %s333 = sphi 0, %s317
      %s339 = sphi 0, %s341
      %s342 = sphi 0, %s339
      %s343 = sphi 0, %s342
      %s359 = sphi 0, %s343
      %s365 = sphi 0, %s367
      %s368 = sphi 0, %s365
      %s369 = sphi 0, %s368
      %s385 = sphi 0, %s369
      %s391 = sphi 0, %s393
      %s394 = sphi 0, %s391
      %s395 = sphi 0, %s394
      %s411 = sphi 0, %s395
      %s417 = sphi 0, %s419
      %s420 = sphi 0, %s417
      %s421 = sphi 0, %s420
      %s437 = sphi 0, %s421
      %s443 = sphi 0, %s445
      %s446 = sphi 0, %s443
      %s447 = sphi 0, %s446
      %s463 = sphi 0, %s447
      %s469 = sphi 0, %s471
      %s472 = sphi 0, %s469
      %s473 = sphi 0, %s472
      %s489 = sphi 0, %s473
      %s495 = sphi 0, %s497
      %s498 = sphi 0, %s495
      %s499 = sphi 0, %s498
      %s515 = sphi 0, %s499
      %s521 = sphi 0, %s523
      %s524 = sphi 0, %s521
      %s525 = sphi 0, %s524
      %s541 = sphi 0, %s525
      %s547 = sphi 0, %s549
      %s550 = sphi 0, %s547
      %s551 = sphi 0, %s550
      %s567 = sphi 0, %s551
      %s573 = sphi 0, %s575
      %s576 = sphi 0, %s573
      %s577 = sphi 0, %s576
      %s593 = sphi 0, %s577
    $region4: #{tpu_custom_call.1} parent=1 // loop_header_branch
      %44 = sbr.rel (%p42) target = $region8
    $region5: #{tpu_custom_call.1} parent=1 // loop_body
      %s46 = ssub.s32 %s41, 1
      %s47 = ssub.s32 %s41, 2
      %s54 = sadd.s32 1, %s49
      %p55 = scmp.ge.s32.totalorder %s54, 2
      %s56 = scalar_select %p55, 0, %s54
      %s57 = sadd.s32 1, %s48
      %s58 = scalar_select %p55, %s57, %s48
      %p59 = scmp.ge.s32.totalorder %s58, 2
      %s60 = scalar_select %p59, 0, %s58
      %s61 = ssub.s32 %s48, %s60
      %p62 = scmp.eq.s32.totalorder %s61, 0
      %s64 = sadd.s32 %s63, 1
      %s65 = scalar_select %p62, %s63, %s64
      %p68 = pneg %p62
      %p69 = scmp.eq.s32.totalorder %s41, 3
      %p70 = por %p68, %p69
      %p71 = scmp.ne.s32.totalorder %s63, %s66
      %p72 = scmp.eq.s32.totalorder %s41, 0
      %p73 = por %p71, %p72
      %p74 = scmp.ne.s32.totalorder %s63, %s66
      %p75 = scmp.eq.s32.totalorder %s46, 3
      %p76 = por %p74, %p75
      %p77 = scmp.ne.s32.totalorder %s66, %s67
      %p78 = scmp.eq.s32.totalorder %s46, 0
      %p79 = por %p77, %p78
      %p80 = scmp.ne.s32.totalorder %s66, %s67
      %p81 = scmp.eq.s32.totalorder %s47, 3
      %p82 = por %p80, %p81
      %p84 = scmp.ne.s32.totalorder %s67, %s83
      %p85 = scmp.eq.s32.totalorder %s47, 0
      %p86 = por %p84, %p85
      %s87 = ssub.s32 %s48, %s60
      %p88 = scmp.eq.s32.totalorder %s87, 0
      %s90 = sadd.s32 %s89, 1
      %s91 = scalar_select %p88, %s89, %s90
      %p94 = pneg %p88
      %p95 = scmp.eq.s32.totalorder %s41, 3
      %p96 = por %p94, %p95
      %p97 = scmp.ne.s32.totalorder %s89, %s92
      %p98 = scmp.eq.s32.totalorder %s41, 0
      %p99 = por %p97, %p98
      %p100 = scmp.ne.s32.totalorder %s89, %s92
      %p101 = scmp.eq.s32.totalorder %s46, 3
      %p102 = por %p100, %p101
      %p103 = scmp.ne.s32.totalorder %s92, %s93
      %p104 = scmp.eq.s32.totalorder %s46, 0
      %p105 = por %p103, %p104
      %p106 = scmp.ne.s32.totalorder %s92, %s93
      %p107 = scmp.eq.s32.totalorder %s47, 3
      %p108 = por %p106, %p107
      %p110 = scmp.ne.s32.totalorder %s93, %s109
      %p111 = scmp.eq.s32.totalorder %s47, 0
      %p112 = por %p110, %p111
      %s114 = sadd.s32 %s113, 1
      %p117 = scmp.eq.s32.totalorder %s41, 3
      %p118 = scmp.ne.s32.totalorder %s113, %s115
      %p119 = scmp.eq.s32.totalorder %s41, 0
      %p120 = por %p118, %p119
      %p121 = scmp.ne.s32.totalorder %s113, %s115
      %p122 = scmp.eq.s32.totalorder %s46, 3
      %p123 = por %p121, %p122
      %p124 = scmp.ne.s32.totalorder %s115, %s116
      %p125 = scmp.eq.s32.totalorder %s46, 0
      %p126 = por %p124, %p125
      %p127 = scmp.ne.s32.totalorder %s115, %s116
      %p128 = scmp.eq.s32.totalorder %s47, 3
      %p129 = por %p127, %p128
      %p131 = scmp.ne.s32.totalorder %s116, %s130
      %p132 = scmp.eq.s32.totalorder %s47, 0
      %p133 = por %p131, %p132
      %s135 = sadd.s32 %s134, 1
      %p138 = scmp.eq.s32.totalorder %s41, 3
      %p139 = scmp.ne.s32.totalorder %s134, %s136
      %p140 = scmp.eq.s32.totalorder %s41, 0
      %p141 = por %p139, %p140
      %p142 = scmp.ne.s32.totalorder %s134, %s136
      %p143 = scmp.eq.s32.totalorder %s46, 3
      %p144 = por %p142, %p143
      %p145 = scmp.ne.s32.totalorder %s136, %s137
      %p146 = scmp.eq.s32.totalorder %s46, 0
      %p147 = por %p145, %p146
      %p148 = scmp.ne.s32.totalorder %s136, %s137
      %p149 = scmp.eq.s32.totalorder %s47, 3
      %p150 = por %p148, %p149
      %p152 = scmp.ne.s32.totalorder %s137, %s151
      %p153 = scmp.eq.s32.totalorder %s47, 0
      %p154 = por %p152, %p153
      %s155 = ssub.s32 %s49, %s56
      %p156 = scmp.eq.s32.totalorder %s155, 0
      %s158 = sadd.s32 %s157, 1
      %s159 = scalar_select %p156, %s157, %s158
      %p162 = pneg %p156
      %p163 = scmp.eq.s32.totalorder %s41, 3
      %p164 = por %p162, %p163
      %p165 = scmp.ne.s32.totalorder %s157, %s160
      %p166 = scmp.eq.s32.totalorder %s41, 0
      %p167 = por %p165, %p166
      %p168 = scmp.ne.s32.totalorder %s157, %s160
      %p169 = scmp.eq.s32.totalorder %s46, 3
      %p170 = por %p168, %p169
      %p171 = scmp.ne.s32.totalorder %s160, %s161
      %p172 = scmp.eq.s32.totalorder %s46, 0
      %p173 = por %p171, %p172
      %p174 = scmp.ne.s32.totalorder %s160, %s161
      %p175 = scmp.eq.s32.totalorder %s47, 3
      %p176 = por %p174, %p175
      %p178 = scmp.ne.s32.totalorder %s161, %s177
      %p179 = scmp.eq.s32.totalorder %s47, 0
      %p180 = por %p178, %p179
      %s181 = ssub.s32 %s49, %s56
      %p182 = scmp.eq.s32.totalorder %s181, 0
      %s184 = sadd.s32 %s183, 1
      %s185 = scalar_select %p182, %s183, %s184
      %p188 = pneg %p182
      %p189 = scmp.eq.s32.totalorder %s41, 3
      %p190 = por %p188, %p189
      %p191 = scmp.ne.s32.totalorder %s183, %s186
      %p192 = scmp.eq.s32.totalorder %s41, 0
      %p193 = por %p191, %p192
      %p194 = scmp.ne.s32.totalorder %s183, %s186
      %p195 = scmp.eq.s32.totalorder %s46, 3
      %p196 = por %p194, %p195
      %p197 = scmp.ne.s32.totalorder %s186, %s187
      %p198 = scmp.eq.s32.totalorder %s46, 0
      %p199 = por %p197, %p198
      %p200 = scmp.ne.s32.totalorder %s186, %s187
      %p201 = scmp.eq.s32.totalorder %s47, 3
      %p202 = por %p200, %p201
      %p204 = scmp.ne.s32.totalorder %s187, %s203
      %p205 = scmp.eq.s32.totalorder %s47, 0
      %p206 = por %p204, %p205
      %s207 = ssub.s32 %s49, %s56
      %p208 = scmp.eq.s32.totalorder %s207, 0
      %s210 = sadd.s32 %s209, 1
      %s211 = scalar_select %p208, %s209, %s210
      %p214 = pneg %p208
      %p215 = scmp.eq.s32.totalorder %s41, 3
      %p216 = por %p214, %p215
      %p217 = scmp.ne.s32.totalorder %s209, %s212
      %p218 = scmp.eq.s32.totalorder %s41, 0
      %p219 = por %p217, %p218
      %p220 = scmp.ne.s32.totalorder %s209, %s212
      %p221 = scmp.eq.s32.totalorder %s46, 3
      %p222 = por %p220, %p221
      %p223 = scmp.ne.s32.totalorder %s212, %s213
      %p224 = scmp.eq.s32.totalorder %s46, 0
      %p225 = por %p223, %p224
      %p226 = scmp.ne.s32.totalorder %s212, %s213
      %p227 = scmp.eq.s32.totalorder %s47, 3
      %p228 = por %p226, %p227
      %p230 = scmp.ne.s32.totalorder %s213, %s229
      %p231 = scmp.eq.s32.totalorder %s47, 0
      %p232 = por %p230, %p231
      %s233 = ssub.s32 %s49, %s56
      %p234 = scmp.eq.s32.totalorder %s233, 0
      %s236 = sadd.s32 %s235, 1
      %s237 = scalar_select %p234, %s235, %s236
      %p240 = pneg %p234
      %p241 = scmp.eq.s32.totalorder %s41, 3
      %p242 = por %p240, %p241
      %p243 = scmp.ne.s32.totalorder %s235, %s238
      %p244 = scmp.eq.s32.totalorder %s41, 0
      %p245 = por %p243, %p244
      %p246 = scmp.ne.s32.totalorder %s235, %s238
      %p247 = scmp.eq.s32.totalorder %s46, 3
      %p248 = por %p246, %p247
      %p249 = scmp.ne.s32.totalorder %s238, %s239
      %p250 = scmp.eq.s32.totalorder %s46, 0
      %p251 = por %p249, %p250
      %p252 = scmp.ne.s32.totalorder %s238, %s239
      %p253 = scmp.eq.s32.totalorder %s47, 3
      %p254 = por %p252, %p253
      %p256 = scmp.ne.s32.totalorder %s239, %s255
      %p257 = scmp.eq.s32.totalorder %s47, 0
      %p258 = por %p256, %p257
      %s259 = ssub.s32 %s49, %s56
      %p260 = scmp.eq.s32.totalorder %s259, 0
      %s262 = sadd.s32 %s261, 1
      %s263 = scalar_select %p260, %s261, %s262
      %p266 = pneg %p260
      %p267 = scmp.eq.s32.totalorder %s41, 3
      %p268 = por %p266, %p267
      %p269 = scmp.ne.s32.totalorder %s261, %s264
      %p270 = scmp.eq.s32.totalorder %s41, 0
      %p271 = por %p269, %p270
      %p272 = scmp.ne.s32.totalorder %s261, %s264
      %p273 = scmp.eq.s32.totalorder %s46, 3
      %p274 = por %p272, %p273
      %p275 = scmp.ne.s32.totalorder %s264, %s265
      %p276 = scmp.eq.s32.totalorder %s46, 0
      %p277 = por %p275, %p276
      %p278 = scmp.ne.s32.totalorder %s264, %s265
      %p279 = scmp.eq.s32.totalorder %s47, 3
      %p280 = por %p278, %p279
      %p282 = scmp.ne.s32.totalorder %s265, %s281
      %p283 = scmp.eq.s32.totalorder %s47, 0
      %p284 = por %p282, %p283
      %s285 = ssub.s32 %s49, %s56
      %p286 = scmp.eq.s32.totalorder %s285, 0
      %s288 = sadd.s32 %s287, 1
      %s289 = scalar_select %p286, %s287, %s288
      %p292 = pneg %p286
      %p293 = scmp.eq.s32.totalorder %s41, 3
      %p294 = por %p292, %p293
      %p295 = scmp.ne.s32.totalorder %s287, %s290
      %p296 = scmp.eq.s32.totalorder %s41, 0
      %p297 = por %p295, %p296
      %p298 = scmp.ne.s32.totalorder %s287, %s290
      %p299 = scmp.eq.s32.totalorder %s46, 3
      %p300 = por %p298, %p299
      %p301 = scmp.ne.s32.totalorder %s290, %s291
      %p302 = scmp.eq.s32.totalorder %s46, 0
      %p303 = por %p301, %p302
      %p304 = scmp.ne.s32.totalorder %s290, %s291
      %p305 = scmp.eq.s32.totalorder %s47, 3
      %p306 = por %p304, %p305
      %p308 = scmp.ne.s32.totalorder %s291, %s307
      %p309 = scmp.eq.s32.totalorder %s47, 0
      %p310 = por %p308, %p309
      %s311 = ssub.s32 %s49, %s56
      %p312 = scmp.eq.s32.totalorder %s311, 0
      %s314 = sadd.s32 %s313, 1
      %s315 = scalar_select %p312, %s313, %s314
      %p318 = pneg %p312
      %p319 = scmp.eq.s32.totalorder %s41, 3
      %p320 = por %p318, %p319
      %p321 = scmp.ne.s32.totalorder %s313, %s316
      %p322 = scmp.eq.s32.totalorder %s41, 0
      %p323 = por %p321, %p322
      %p324 = scmp.ne.s32.totalorder %s313, %s316
      %p325 = scmp.eq.s32.totalorder %s46, 3
      %p326 = por %p324, %p325
      %p327 = scmp.ne.s32.totalorder %s316, %s317
      %p328 = scmp.eq.s32.totalorder %s46, 0
      %p329 = por %p327, %p328
      %p330 = scmp.ne.s32.totalorder %s316, %s317
      %p331 = scmp.eq.s32.totalorder %s47, 3
      %p332 = por %p330, %p331
      %p334 = scmp.ne.s32.totalorder %s317, %s333
      %p335 = scmp.eq.s32.totalorder %s47, 0
      %p336 = por %p334, %p335
      %s337 = ssub.s32 %s49, %s56
      %p338 = scmp.eq.s32.totalorder %s337, 0
      %s340 = sadd.s32 %s339, 1
      %s341 = scalar_select %p338, %s339, %s340
      %p344 = pneg %p338
      %p345 = scmp.eq.s32.totalorder %s41, 3
      %p346 = por %p344, %p345
      %p347 = scmp.ne.s32.totalorder %s339, %s342
      %p348 = scmp.eq.s32.totalorder %s41, 0
      %p349 = por %p347, %p348
      %p350 = scmp.ne.s32.totalorder %s339, %s342
      %p351 = scmp.eq.s32.totalorder %s46, 3
      %p352 = por %p350, %p351
      %p353 = scmp.ne.s32.totalorder %s342, %s343
      %p354 = scmp.eq.s32.totalorder %s46, 0
      %p355 = por %p353, %p354
      %p356 = scmp.ne.s32.totalorder %s342, %s343
      %p357 = scmp.eq.s32.totalorder %s47, 3
      %p358 = por %p356, %p357
      %p360 = scmp.ne.s32.totalorder %s343, %s359
      %p361 = scmp.eq.s32.totalorder %s47, 0
      %p362 = por %p360, %p361
      %s363 = ssub.s32 %s49, %s56
      %p364 = scmp.eq.s32.totalorder %s363, 0
      %s366 = sadd.s32 %s365, 1
      %s367 = scalar_select %p364, %s365, %s366
      %p370 = pneg %p364
      %p371 = scmp.eq.s32.totalorder %s41, 3
      %p372 = por %p370, %p371
      %p373 = scmp.ne.s32.totalorder %s365, %s368
      %p374 = scmp.eq.s32.totalorder %s41, 0
      %p375 = por %p373, %p374
      %p376 = scmp.ne.s32.totalorder %s365, %s368
      %p377 = scmp.eq.s32.totalorder %s46, 3
      %p378 = por %p376, %p377
      %p379 = scmp.ne.s32.totalorder %s368, %s369
      %p380 = scmp.eq.s32.totalorder %s46, 0
      %p381 = por %p379, %p380
      %p382 = scmp.ne.s32.totalorder %s368, %s369
      %p383 = scmp.eq.s32.totalorder %s47, 3
      %p384 = por %p382, %p383
      %p386 = scmp.ne.s32.totalorder %s369, %s385
      %p387 = scmp.eq.s32.totalorder %s47, 0
      %p388 = por %p386, %p387
      %s389 = ssub.s32 %s49, %s56
      %p390 = scmp.eq.s32.totalorder %s389, 0
      %s392 = sadd.s32 %s391, 1
      %s393 = scalar_select %p390, %s391, %s392
      %p396 = pneg %p390
      %p397 = scmp.eq.s32.totalorder %s41, 3
      %p398 = por %p396, %p397
      %p399 = scmp.ne.s32.totalorder %s391, %s394
      %p400 = scmp.eq.s32.totalorder %s41, 0
      %p401 = por %p399, %p400
      %p402 = scmp.ne.s32.totalorder %s391, %s394
      %p403 = scmp.eq.s32.totalorder %s46, 3
      %p404 = por %p402, %p403
      %p405 = scmp.ne.s32.totalorder %s394, %s395
      %p406 = scmp.eq.s32.totalorder %s46, 0
      %p407 = por %p405, %p406
      %p408 = scmp.ne.s32.totalorder %s394, %s395
      %p409 = scmp.eq.s32.totalorder %s47, 3
      %p410 = por %p408, %p409
      %p412 = scmp.ne.s32.totalorder %s395, %s411
      %p413 = scmp.eq.s32.totalorder %s47, 0
      %p414 = por %p412, %p413
      %s415 = ssub.s32 %s49, %s56
      %p416 = scmp.eq.s32.totalorder %s415, 0
      %s418 = sadd.s32 %s417, 1
      %s419 = scalar_select %p416, %s417, %s418
      %p422 = pneg %p416
      %p423 = scmp.eq.s32.totalorder %s41, 3
      %p424 = por %p422, %p423
      %p425 = scmp.ne.s32.totalorder %s417, %s420
      %p426 = scmp.eq.s32.totalorder %s41, 0
      %p427 = por %p425, %p426
      %p428 = scmp.ne.s32.totalorder %s417, %s420
      %p429 = scmp.eq.s32.totalorder %s46, 3
      %p430 = por %p428, %p429
      %p431 = scmp.ne.s32.totalorder %s420, %s421
      %p432 = scmp.eq.s32.totalorder %s46, 0
      %p433 = por %p431, %p432
      %p434 = scmp.ne.s32.totalorder %s420, %s421
      %p435 = scmp.eq.s32.totalorder %s47, 3
      %p436 = por %p434, %p435
      %p438 = scmp.ne.s32.totalorder %s421, %s437
      %p439 = scmp.eq.s32.totalorder %s47, 0
      %p440 = por %p438, %p439
      %s441 = ssub.s32 %s49, %s56
      %p442 = scmp.eq.s32.totalorder %s441, 0
      %s444 = sadd.s32 %s443, 1
      %s445 = scalar_select %p442, %s443, %s444
      %p448 = pneg %p442
      %p449 = scmp.eq.s32.totalorder %s41, 3
      %p450 = por %p448, %p449
      %p451 = scmp.ne.s32.totalorder %s443, %s446
      %p452 = scmp.eq.s32.totalorder %s41, 0
      %p453 = por %p451, %p452
      %p454 = scmp.ne.s32.totalorder %s443, %s446
      %p455 = scmp.eq.s32.totalorder %s46, 3
      %p456 = por %p454, %p455
      %p457 = scmp.ne.s32.totalorder %s446, %s447
      %p458 = scmp.eq.s32.totalorder %s46, 0
      %p459 = por %p457, %p458
      %p460 = scmp.ne.s32.totalorder %s446, %s447
      %p461 = scmp.eq.s32.totalorder %s47, 3
      %p462 = por %p460, %p461
      %p464 = scmp.ne.s32.totalorder %s447, %s463
      %p465 = scmp.eq.s32.totalorder %s47, 0
      %p466 = por %p464, %p465
      %s467 = ssub.s32 %s49, %s56
      %p468 = scmp.eq.s32.totalorder %s467, 0
      %s470 = sadd.s32 %s469, 1
      %s471 = scalar_select %p468, %s469, %s470
      %p474 = pneg %p468
      %p475 = scmp.eq.s32.totalorder %s41, 3
      %p476 = por %p474, %p475
      %p477 = scmp.ne.s32.totalorder %s469, %s472
      %p478 = scmp.eq.s32.totalorder %s41, 0
      %p479 = por %p477, %p478
      %p480 = scmp.ne.s32.totalorder %s469, %s472
      %p481 = scmp.eq.s32.totalorder %s46, 3
      %p482 = por %p480, %p481
      %p483 = scmp.ne.s32.totalorder %s472, %s473
      %p484 = scmp.eq.s32.totalorder %s46, 0
      %p485 = por %p483, %p484
      %p486 = scmp.ne.s32.totalorder %s472, %s473
      %p487 = scmp.eq.s32.totalorder %s47, 3
      %p488 = por %p486, %p487
      %p490 = scmp.ne.s32.totalorder %s473, %s489
      %p491 = scmp.eq.s32.totalorder %s47, 0
      %p492 = por %p490, %p491
      %s493 = ssub.s32 %s49, %s56
      %p494 = scmp.eq.s32.totalorder %s493, 0
      %s496 = sadd.s32 %s495, 1
      %s497 = scalar_select %p494, %s495, %s496
      %p500 = pneg %p494
      %p501 = scmp.eq.s32.totalorder %s41, 3
      %p502 = por %p500, %p501
      %p503 = scmp.ne.s32.totalorder %s495, %s498
      %p504 = scmp.eq.s32.totalorder %s41, 0
      %p505 = por %p503, %p504
      %p506 = scmp.ne.s32.totalorder %s495, %s498
      %p507 = scmp.eq.s32.totalorder %s46, 3
      %p508 = por %p506, %p507
      %p509 = scmp.ne.s32.totalorder %s498, %s499
      %p510 = scmp.eq.s32.totalorder %s46, 0
      %p511 = por %p509, %p510
      %p512 = scmp.ne.s32.totalorder %s498, %s499
      %p513 = scmp.eq.s32.totalorder %s47, 3
      %p514 = por %p512, %p513
      %p516 = scmp.ne.s32.totalorder %s499, %s515
      %p517 = scmp.eq.s32.totalorder %s47, 0
      %p518 = por %p516, %p517
      %s519 = ssub.s32 %s49, %s56
      %p520 = scmp.eq.s32.totalorder %s519, 0
      %s522 = sadd.s32 %s521, 1
      %s523 = scalar_select %p520, %s521, %s522
      %p526 = pneg %p520
      %p527 = scmp.eq.s32.totalorder %s41, 3
      %p528 = por %p526, %p527
      %p529 = scmp.ne.s32.totalorder %s521, %s524
      %p530 = scmp.eq.s32.totalorder %s41, 0
      %p531 = por %p529, %p530
      %p532 = scmp.ne.s32.totalorder %s521, %s524
      %p533 = scmp.eq.s32.totalorder %s46, 3
      %p534 = por %p532, %p533
      %p535 = scmp.ne.s32.totalorder %s524, %s525
      %p536 = scmp.eq.s32.totalorder %s46, 0
      %p537 = por %p535, %p536
      %p538 = scmp.ne.s32.totalorder %s524, %s525
      %p539 = scmp.eq.s32.totalorder %s47, 3
      %p540 = por %p538, %p539
      %p542 = scmp.ne.s32.totalorder %s525, %s541
      %p543 = scmp.eq.s32.totalorder %s47, 0
      %p544 = por %p542, %p543
      %s545 = ssub.s32 %s49, %s56
      %p546 = scmp.eq.s32.totalorder %s545, 0
      %s548 = sadd.s32 %s547, 1
      %s549 = scalar_select %p546, %s547, %s548
      %p552 = pneg %p546
      %p553 = scmp.eq.s32.totalorder %s41, 3
      %p554 = por %p552, %p553
      %p555 = scmp.ne.s32.totalorder %s547, %s550
      %p556 = scmp.eq.s32.totalorder %s41, 0
      %p557 = por %p555, %p556
      %p558 = scmp.ne.s32.totalorder %s547, %s550
      %p559 = scmp.eq.s32.totalorder %s46, 3
      %p560 = por %p558, %p559
      %p561 = scmp.ne.s32.totalorder %s550, %s551
      %p562 = scmp.eq.s32.totalorder %s46, 0
      %p563 = por %p561, %p562
      %p564 = scmp.ne.s32.totalorder %s550, %s551
      %p565 = scmp.eq.s32.totalorder %s47, 3
      %p566 = por %p564, %p565
      %p568 = scmp.ne.s32.totalorder %s551, %s567
      %p569 = scmp.eq.s32.totalorder %s47, 0
      %p570 = por %p568, %p569
      %s571 = ssub.s32 %s48, %s60
      %p572 = scmp.eq.s32.totalorder %s571, 0
      %s574 = sadd.s32 %s573, 1
      %s575 = scalar_select %p572, %s573, %s574
      %p578 = pneg %p572
      %p579 = scmp.eq.s32.totalorder %s41, 3
      %p580 = por %p578, %p579
      %p581 = scmp.ne.s32.totalorder %s573, %s576
      %p582 = scmp.eq.s32.totalorder %s41, 0
      %p583 = por %p581, %p582
      %p584 = scmp.ne.s32.totalorder %s573, %s576
      %p585 = scmp.eq.s32.totalorder %s46, 3
      %p586 = por %p584, %p585
      %p587 = scmp.ne.s32.totalorder %s576, %s577
      %p588 = scmp.eq.s32.totalorder %s46, 0
      %p589 = por %p587, %p588
      %p590 = scmp.ne.s32.totalorder %s576, %s577
      %p591 = scmp.eq.s32.totalorder %s47, 3
      %p592 = por %p590, %p591
      %p594 = scmp.ne.s32.totalorder %s577, %s593
      %p595 = scmp.eq.s32.totalorder %s47, 0
      %p596 = por %p594, %p595
      %p597 = scmp.le.s32.totalorder 1, %s41
      %p598 = scmp.lt.s32.totalorder %s41, 5
      %p599 = pnand %p597, %p598
      %p600 = pneg %p599
      // Predicated region
      $region9: #{tpu_custom_call.1} parent=5 // pred_check
        _
      $region10: #{tpu_custom_call.1} parent=5 // pred_check_branch
        %602 = sbr.rel (%p599) target = $region12
      $region11: #{tpu_custom_call.1} parent=5 // pred_region
        %s603 = ssub.s32 %s41, 1
        // Predicated region
        $region13: #{tpu_custom_call.1} parent=11 // pred_check
          %p604 = pneg %p126
        $region14: #{tpu_custom_call.1} parent=11 // pred_check_branch
          %606 = sbr.rel (%p604) target = $region16
        $region15: #{tpu_custom_call.1} parent=11 // pred_region
          _
        $region16: #{tpu_custom_call.1} parent=11 // pred_fallthru
          _
        // Predicated region
        $region17: #{tpu_custom_call.1} parent=11 // pred_check
          %p607 = pneg %p147
        $region18: #{tpu_custom_call.1} parent=11 // pred_check_branch
          %609 = sbr.rel (%p607) target = $region20
        $region19: #{tpu_custom_call.1} parent=11 // pred_region
          %611 = vsyncadd [#allocation6], 0
          %s613 = sshll.u32 %s3, 4
          %s614 = int_to_ptr.hbm [resolvable:$true] %s613
          %s615 = sshll.u32 [#allocation7], 4
          %s616 = int_to_ptr.vmem [resolvable:$true] %s615
          %618 = dma.hbm_to_vmem [thread:$0]  %s614, 16, %s616, [#allocation6]
        $region20: #{tpu_custom_call.1} parent=11 // pred_fallthru
          _
      $region12: #{tpu_custom_call.1} parent=5 // pred_fallthru
        _
      %p619 = scmp.lt.s32.totalorder %s41, 4
      // Predicated region
      $region21: #{tpu_custom_call.1} parent=5 // pred_check
        %p620 = pneg %p619
      $region22: #{tpu_custom_call.1} parent=5 // pred_check_branch
        %622 = sbr.rel (%p620) target = $region24
      $region23: #{tpu_custom_call.1} parent=5 // pred_region
        // Predicated region
        $region25: #{tpu_custom_call.1} parent=23 // pred_check
          %p623 = pneg %p73
        $region26: #{tpu_custom_call.1} parent=23 // pred_check_branch
          %625 = sbr.rel (%p623) target = $region28
        $region27: #{tpu_custom_call.1} parent=23 // pred_region
          %s626 = sand.u32 %s63, 1
          %s627 = scalar_lea.sflag [#allocation3], %s626
          %s628 = sand.u32 %s63, 1
          %s629 = smul.addr %s628, 8
          %s630 = scalar_lea.vmem [#allocation2], %s629
          %632 = vsyncadd %s627, 0
          %s633 = smul.addr %s48, 8
          %s634 = scalar_lea.hbm %s0, %s633
          %s636 = sshll.u32 %s634, 4
          %s637 = int_to_ptr.hbm [resolvable:$true] %s636
          %s638 = sshll.u32 %s630, 4
          %s639 = int_to_ptr.vmem [resolvable:$true] %s638
          %641 = dma.hbm_to_vmem [thread:$0]  %s637, 128, %s639, %s627
        $region28: #{tpu_custom_call.1} parent=23 // pred_fallthru
          _
        // Predicated region
        $region29: #{tpu_custom_call.1} parent=23 // pred_check
          %p642 = pneg %p99
        $region30: #{tpu_custom_call.1} parent=23 // pred_check_branch
          %644 = sbr.rel (%p642) target = $region32
        $region31: #{tpu_custom_call.1} parent=23 // pred_region
          %s645 = sand.u32 %s41, 1
          %s646 = scalar_lea.sflag [#allocation6], %s645
          %s647 = sand.u32 %s89, 1
          %s648 = scalar_lea.vmem [#allocation5], %s647
          %650 = vsyncadd %s646, 0
          %s651 = scalar_lea.hbm %s1, %s48
          %s653 = sshll.u32 %s651, 4
          %s654 = int_to_ptr.hbm [resolvable:$true] %s653
          %s655 = sshll.u32 %s648, 4
          %s656 = int_to_ptr.vmem [resolvable:$true] %s655
          %658 = dma.hbm_to_vmem [thread:$0]  %s654, 16, %s656, %s646
        $region32: #{tpu_custom_call.1} parent=23 // pred_fallthru
          _
        // Predicated region
        $region33: #{tpu_custom_call.1} parent=23 // pred_check
          %p659 = pneg %p167
        $region34: #{tpu_custom_call.1} parent=23 // pred_check_branch
          %661 = sbr.rel (%p659) target = $region36
        $region35: #{tpu_custom_call.1} parent=23 // pred_region
          %p662 = scmp.lt.s32.totalorder %s49, 1
          %s663 = scalar_select %p662, %s49, 1
          %s664 = smul.addr %s663, 4
          %s665 = smul.addr %s664, 4
          %s666 = scalar_lea.vmem %s4, %s665
        $region36: #{tpu_custom_call.1} parent=23 // pred_fallthru
          _
        // Predicated region
        $region37: #{tpu_custom_call.1} parent=23 // pred_check
          %p667 = pneg %p193
        $region38: #{tpu_custom_call.1} parent=23 // pred_check_branch
          %669 = sbr.rel (%p667) target = $region40
        $region39: #{tpu_custom_call.1} parent=23 // pred_region
          %p670 = scmp.lt.s32.totalorder %s49, 1
          %s671 = scalar_select %p670, %s49, 1
          %s672 = scalar_lea.vmem %s5, %s671
        $region40: #{tpu_custom_call.1} parent=23 // pred_fallthru
          _
        // Predicated region
        $region41: #{tpu_custom_call.1} parent=23 // pred_check
          %p673 = pneg %p219
        $region42: #{tpu_custom_call.1} parent=23 // pred_check_branch
          %675 = sbr.rel (%p673) target = $region44
        $region43: #{tpu_custom_call.1} parent=23 // pred_region
          %p676 = scmp.lt.s32.totalorder %s49, 1
          %s677 = scalar_select %p676, %s49, 1
          %s678 = smul.addr %s677, 4
          %s679 = smul.addr %s678, 4
          %s680 = scalar_lea.vmem %s6, %s679
        $region44: #{tpu_custom_call.1} parent=23 // pred_fallthru
          _
        // Predicated region
        $region45: #{tpu_custom_call.1} parent=23 // pred_check
          %p681 = pneg %p245
        $region46: #{tpu_custom_call.1} parent=23 // pred_check_branch
          %683 = sbr.rel (%p681) target = $region48
        $region47: #{tpu_custom_call.1} parent=23 // pred_region
          %p684 = scmp.lt.s32.totalorder %s49, 1
          %s685 = scalar_select %p684, %s49, 1
          %s686 = scalar_lea.vmem %s7, %s685
        $region48: #{tpu_custom_call.1} parent=23 // pred_fallthru
          _
        // Predicated region
        $region49: #{tpu_custom_call.1} parent=23 // pred_check
          %p687 = pneg %p271
        $region50: #{tpu_custom_call.1} parent=23 // pred_check_branch
          %689 = sbr.rel (%p687) target = $region52
        $region51: #{tpu_custom_call.1} parent=23 // pred_region
          %p690 = scmp.lt.s32.totalorder %s49, 1
          %s691 = scalar_select %p690, %s49, 1
          %s692 = smul.addr %s691, 4
          %s693 = smul.addr %s692, 4
          %s694 = scalar_lea.vmem %s8, %s693
        $region52: #{tpu_custom_call.1} parent=23 // pred_fallthru
          _
        // Predicated region
        $region53: #{tpu_custom_call.1} parent=23 // pred_check
          %p695 = pneg %p297
        $region54: #{tpu_custom_call.1} parent=23 // pred_check_branch
          %697 = sbr.rel (%p695) target = $region56
        $region55: #{tpu_custom_call.1} parent=23 // pred_region
          %p698 = scmp.lt.s32.totalorder %s49, 1
          %s699 = scalar_select %p698, %s49, 1
          %s700 = scalar_lea.vmem %s9, %s699
        $region56: #{tpu_custom_call.1} parent=23 // pred_fallthru
          _
        // Predicated region
        $region57: #{tpu_custom_call.1} parent=23 // pred_check
          %p701 = pneg %p323
        $region58: #{tpu_custom_call.1} parent=23 // pred_check_branch
          %703 = sbr.rel (%p701) target = $region60
        $region59: #{tpu_custom_call.1} parent=23 // pred_region
          %s704 = sand.u32 %s41, 1
          %s705 = scalar_lea.sflag [#allocation9], %s704
          %s706 = sand.u32 %s313, 1
          %s707 = smul.addr %s706, 16
          %s708 = scalar_lea.vmem [#allocation8], %s707
          %710 = vsyncadd %s705, 0
          %s711 = smul.addr %s49, 4
          %s712 = smul.addr %s711, 4
          %s713 = scalar_lea.hbm %s10, %s712
          %s714 = sshll.u32 %s713, 4
          %s715 = int_to_ptr.hbm [resolvable:$true] %s714
          %s716 = sshll.u32 %s708, 4
          %s717 = int_to_ptr.vmem [resolvable:$true] %s716
          %722 = dma.hbm_to_vmem [thread:$0]  %s715, 256, %s717, %s705, 64, 64, 4
        $region60: #{tpu_custom_call.1} parent=23 // pred_fallthru
          _
        // Predicated region
        $region61: #{tpu_custom_call.1} parent=23 // pred_check
          %p723 = pneg %p349
        $region62: #{tpu_custom_call.1} parent=23 // pred_check_branch
          %725 = sbr.rel (%p723) target = $region64
        $region63: #{tpu_custom_call.1} parent=23 // pred_region
          %p726 = scmp.lt.s32.totalorder %s49, 1
          %s727 = scalar_select %p726, %s49, 1
          %s728 = scalar_lea.vmem %s11, %s727
        $region64: #{tpu_custom_call.1} parent=23 // pred_fallthru
          _
        // Predicated region
        $region65: #{tpu_custom_call.1} parent=23 // pred_check
          %p729 = pneg %p375
        $region66: #{tpu_custom_call.1} parent=23 // pred_check_branch
          %731 = sbr.rel (%p729) target = $region68
        $region67: #{tpu_custom_call.1} parent=23 // pred_region
          %p732 = scmp.lt.s32.totalorder %s49, 1
          %s733 = scalar_select %p732, %s49, 1
          %s734 = scalar_lea.vmem %s12, %s733
        $region68: #{tpu_custom_call.1} parent=23 // pred_fallthru
          _
        // Predicated region
        $region69: #{tpu_custom_call.1} parent=23 // pred_check
          %p735 = pneg %p401
        $region70: #{tpu_custom_call.1} parent=23 // pred_check_branch
          %737 = sbr.rel (%p735) target = $region72
        $region71: #{tpu_custom_call.1} parent=23 // pred_region
          %s738 = sand.u32 %s41, 1
          %s739 = scalar_lea.sflag [#allocation9], %s738
          %s740 = sand.u32 %s391, 1
          %s741 = scalar_lea.vmem [#allocation10], %s740
          %743 = vsyncadd %s739, 0
          %s744 = scalar_lea.hbm %s13, %s49
          %s746 = sshll.u32 %s744, 4
          %s747 = int_to_ptr.hbm [resolvable:$true] %s746
          %s748 = sshll.u32 %s741, 4
          %s749 = int_to_ptr.vmem [resolvable:$true] %s748
          %751 = dma.hbm_to_vmem [thread:$0]  %s747, 16, %s749, %s739
        $region72: #{tpu_custom_call.1} parent=23 // pred_fallthru
          _
        // Predicated region
        $region73: #{tpu_custom_call.1} parent=23 // pred_check
          %p752 = pneg %p427
        $region74: #{tpu_custom_call.1} parent=23 // pred_check_branch
          %754 = sbr.rel (%p752) target = $region76
        $region75: #{tpu_custom_call.1} parent=23 // pred_region
          %s755 = sand.u32 %s41, 1
          %s756 = scalar_lea.sflag [#allocation12], %s755
          %s757 = sand.u32 %s417, 1
          %s758 = smul.addr %s757, 16
          %s759 = scalar_lea.vmem [#allocation11], %s758
          %761 = vsyncadd %s756, 0
          %s762 = smul.addr %s49, 4
          %s763 = smul.addr %s762, 4
          %s764 = scalar_lea.hbm %s14, %s763
          %s765 = sshll.u32 %s764, 4
          %s766 = int_to_ptr.hbm [resolvable:$true] %s765
          %s767 = sshll.u32 %s759, 4
          %s768 = int_to_ptr.vmem [resolvable:$true] %s767
          %773 = dma.hbm_to_vmem [thread:$0]  %s766, 256, %s768, %s756, 64, 64, 4
        $region76: #{tpu_custom_call.1} parent=23 // pred_fallthru
          _
        // Predicated region
        $region77: #{tpu_custom_call.1} parent=23 // pred_check
          %p774 = pneg %p453
        $region78: #{tpu_custom_call.1} parent=23 // pred_check_branch
          %776 = sbr.rel (%p774) target = $region80
        $region79: #{tpu_custom_call.1} parent=23 // pred_region
          %p777 = scmp.lt.s32.totalorder %s49, 1
          %s778 = scalar_select %p777, %s49, 1
          %s779 = scalar_lea.vmem %s15, %s778
        $region80: #{tpu_custom_call.1} parent=23 // pred_fallthru
          _
        // Predicated region
        $region81: #{tpu_custom_call.1} parent=23 // pred_check
          %p780 = pneg %p479
        $region82: #{tpu_custom_call.1} parent=23 // pred_check_branch
          %782 = sbr.rel (%p780) target = $region84
        $region83: #{tpu_custom_call.1} parent=23 // pred_region
          %p783 = scmp.lt.s32.totalorder %s49, 1
          %s784 = scalar_select %p783, %s49, 1
          %s785 = smul.addr %s784, 8
          %s786 = smul.addr %s785, 4
          %s787 = scalar_lea.vmem %s16, %s786
        $region84: #{tpu_custom_call.1} parent=23 // pred_fallthru
          _
        // Predicated region
        $region85: #{tpu_custom_call.1} parent=23 // pred_check
          %p788 = pneg %p505
        $region86: #{tpu_custom_call.1} parent=23 // pred_check_branch
          %790 = sbr.rel (%p788) target = $region88
        $region87: #{tpu_custom_call.1} parent=23 // pred_region
          %p791 = scmp.lt.s32.totalorder %s49, 1
          %s792 = scalar_select %p791, %s49, 1
          %s793 = scalar_lea.vmem %s17, %s792
        $region88: #{tpu_custom_call.1} parent=23 // pred_fallthru
          _
        // Predicated region
        $region89: #{tpu_custom_call.1} parent=23 // pred_check
          %p794 = pneg %p531
        $region90: #{tpu_custom_call.1} parent=23 // pred_check_branch
          %796 = sbr.rel (%p794) target = $region92
        $region91: #{tpu_custom_call.1} parent=23 // pred_region
          %p797 = scmp.lt.s32.totalorder %s49, 1
          %s798 = scalar_select %p797, %s49, 1
          %s799 = scalar_lea.vmem %s18, %s798
        $region92: #{tpu_custom_call.1} parent=23 // pred_fallthru
          _
        // Predicated region
        $region93: #{tpu_custom_call.1} parent=23 // pred_check
          %p800 = pneg %p557
        $region94: #{tpu_custom_call.1} parent=23 // pred_check_branch
          %802 = sbr.rel (%p800) target = $region96
        $region95: #{tpu_custom_call.1} parent=23 // pred_region
          %s803 = sand.u32 %s41, 1
          %s804 = scalar_lea.sflag [#allocation12], %s803
          %s805 = sand.u32 %s547, 1
          %s806 = scalar_lea.vmem [#allocation13], %s805
          %808 = vsyncadd %s804, 0
          %s809 = scalar_lea.hbm %s19, %s49
          %s811 = sshll.u32 %s809, 4
          %s812 = int_to_ptr.hbm [resolvable:$true] %s811
          %s813 = sshll.u32 %s806, 4
          %s814 = int_to_ptr.vmem [resolvable:$true] %s813
          %816 = dma.hbm_to_vmem [thread:$0]  %s812, 16, %s814, %s804
        $region96: #{tpu_custom_call.1} parent=23 // pred_fallthru
          _
      $region24: #{tpu_custom_call.1} parent=5 // pred_fallthru
        _
      %p817 = scmp.le.s32.totalorder 1, %s41
      %p818 = scmp.lt.s32.totalorder %s41, 5
      %p819 = pnand %p817, %p818
      %p820 = pneg %p819
      // Predicated region
      $region97: #{tpu_custom_call.1} parent=5 // pred_check
        _
      $region98: #{tpu_custom_call.1} parent=5 // pred_check_branch
        %822 = sbr.rel (%p819) target = $region100
      $region99: #{tpu_custom_call.1} parent=5 // pred_region
        %s823 = ssub.s32 %s41, 1
        %s824 = sand.u32 %s66, 1
        %s825 = scalar_lea.sflag [#allocation3], %s824
        %s826 = sand.u32 %s66, 1
        %s827 = smul.addr %s826, 8
        %s828 = scalar_lea.vmem [#allocation2], %s827
        // Predicated region
        $region101: #{tpu_custom_call.1} parent=99 // pred_check
          %p829 = pneg %p79
        $region102: #{tpu_custom_call.1} parent=99 // pred_check_branch
          %831 = sbr.rel (%p829) target = $region104
        $region103: #{tpu_custom_call.1} parent=99 // pred_region
          %833 = dma.done %s825, 128
        $region104: #{tpu_custom_call.1} parent=99 // pred_fallthru
          _
        %s834 = sand.u32 %s46, 1
        %s835 = scalar_lea.sflag [#allocation6], %s834
        %s836 = sand.u32 %s92, 1
        %s837 = scalar_lea.vmem [#allocation5], %s836
        // Predicated region
        $region105: #{tpu_custom_call.1} parent=99 // pred_check
          %p838 = pneg %p105
        $region106: #{tpu_custom_call.1} parent=99 // pred_check_branch
          %840 = sbr.rel (%p838) target = $region108
        $region107: #{tpu_custom_call.1} parent=99 // pred_region
          %842 = dma.done %s835, 16
        $region108: #{tpu_custom_call.1} parent=99 // pred_fallthru
          _
        // Predicated region
        $region109: #{tpu_custom_call.1} parent=99 // pred_check
          %p843 = pneg %p147
        $region110: #{tpu_custom_call.1} parent=99 // pred_check_branch
          %845 = sbr.rel (%p843) target = $region112
        $region111: #{tpu_custom_call.1} parent=99 // pred_region
          %847 = dma.done [#allocation6], 16
        $region112: #{tpu_custom_call.1} parent=99 // pred_fallthru
          _
        %s848 = sand.u32 %s46, 1
        %s849 = scalar_lea.sflag [#allocation9], %s848
        %s850 = sand.u32 %s316, 1
        %s851 = smul.addr %s850, 16
        %s852 = scalar_lea.vmem [#allocation8], %s851
        // Predicated region
        $region113: #{tpu_custom_call.1} parent=99 // pred_check
          %p853 = pneg %p329
        $region114: #{tpu_custom_call.1} parent=99 // pred_check_branch
          %855 = sbr.rel (%p853) target = $region116
        $region115: #{tpu_custom_call.1} parent=99 // pred_region
          %857 = dma.done %s849, 256
        $region116: #{tpu_custom_call.1} parent=99 // pred_fallthru
          _
        %s858 = sand.u32 %s46, 1
        %s859 = scalar_lea.sflag [#allocation9], %s858
        %s860 = sand.u32 %s394, 1
        %s861 = scalar_lea.vmem [#allocation10], %s860
        // Predicated region
        $region117: #{tpu_custom_call.1} parent=99 // pred_check
          %p862 = pneg %p407
        $region118: #{tpu_custom_call.1} parent=99 // pred_check_branch
          %864 = sbr.rel (%p862) target = $region120
        $region119: #{tpu_custom_call.1} parent=99 // pred_region
          %866 = dma.done %s859, 16
        $region120: #{tpu_custom_call.1} parent=99 // pred_fallthru
          _
        %s867 = sand.u32 %s46, 1
        %s868 = scalar_lea.sflag [#allocation12], %s867
        %s869 = sand.u32 %s420, 1
        %s870 = smul.addr %s869, 16
        %s871 = scalar_lea.vmem [#allocation11], %s870
        // Predicated region
        $region121: #{tpu_custom_call.1} parent=99 // pred_check
          %p872 = pneg %p433
        $region122: #{tpu_custom_call.1} parent=99 // pred_check_branch
          %874 = sbr.rel (%p872) target = $region124
        $region123: #{tpu_custom_call.1} parent=99 // pred_region
          %876 = dma.done %s868, 256
        $region124: #{tpu_custom_call.1} parent=99 // pred_fallthru
          _
        %s877 = sand.u32 %s46, 1
        %s878 = scalar_lea.sflag [#allocation12], %s877
        %s879 = sand.u32 %s550, 1
        %s880 = scalar_lea.vmem [#allocation13], %s879
        // Predicated region
        $region125: #{tpu_custom_call.1} parent=99 // pred_check
          %p881 = pneg %p563
        $region126: #{tpu_custom_call.1} parent=99 // pred_check_branch
          %883 = sbr.rel (%p881) target = $region128
        $region127: #{tpu_custom_call.1} parent=99 // pred_region
          %885 = dma.done %s878, 16
        $region128: #{tpu_custom_call.1} parent=99 // pred_fallthru
          _
        %s886 = sand.u32 %s66, 1
        %s887 = scalar_lea.sflag [#allocation3], %s886
        %s888 = sand.u32 %s66, 1
        %s889 = smul.addr %s888, 8
        %s890 = scalar_lea.vmem [#allocation2], %s889
        %p891 = pneg %p79
        %p892 = pneg %p76
        %s893 = sand.u32 %s46, 1
        %s894 = scalar_lea.sflag [#allocation6], %s893
        %s895 = sand.u32 %s92, 1
        %s896 = scalar_lea.vmem [#allocation5], %s895
        %p897 = pneg %p105
        %p898 = pneg %p102
        %p899 = pneg %p126
        %p900 = pneg %p123
        %p901 = pneg %p147
        %p902 = pneg %p144
        %p903 = scmp.lt.s32.totalorder %s51, 1
        %s904 = scalar_select %p903, %s51, 1
        %s905 = smul.addr %s904, 4
        %s906 = smul.addr %s905, 4
        %s907 = scalar_lea.vmem %s4, %s906
        %p908 = pneg %p173
        %p909 = pneg %p170
        %p910 = scmp.lt.s32.totalorder %s51, 1
        %s911 = scalar_select %p910, %s51, 1
        %s912 = scalar_lea.vmem %s5, %s911
        %p913 = pneg %p199
        %p914 = pneg %p196
        %p915 = scmp.lt.s32.totalorder %s51, 1
        %s916 = scalar_select %p915, %s51, 1
        %s917 = smul.addr %s916, 4
        %s918 = smul.addr %s917, 4
        %s919 = scalar_lea.vmem %s6, %s918
        %p920 = pneg %p225
        %p921 = pneg %p222
        %p922 = scmp.lt.s32.totalorder %s51, 1
        %s923 = scalar_select %p922, %s51, 1
        %s924 = scalar_lea.vmem %s7, %s923
        %p925 = pneg %p251
        %p926 = pneg %p248
        %p927 = scmp.lt.s32.totalorder %s51, 1
        %s928 = scalar_select %p927, %s51, 1
        %s929 = smul.addr %s928, 4
        %s930 = smul.addr %s929, 4
        %s931 = scalar_lea.vmem %s8, %s930
        %p932 = pneg %p277
        %p933 = pneg %p274
        %p934 = scmp.lt.s32.totalorder %s51, 1
        %s935 = scalar_select %p934, %s51, 1
        %s936 = scalar_lea.vmem %s9, %s935
        %p937 = pneg %p303
        %p938 = pneg %p300
        %s939 = sand.u32 %s46, 1
        %s940 = scalar_lea.sflag [#allocation9], %s939
        %s941 = sand.u32 %s316, 1
        %s942 = smul.addr %s941, 16
        %s943 = scalar_lea.vmem [#allocation8], %s942
        %p944 = pneg %p329
        %p945 = pneg %p326
        %p946 = scmp.lt.s32.totalorder %s51, 1
        %s947 = scalar_select %p946, %s51, 1
        %s948 = scalar_lea.vmem %s11, %s947
        %p949 = pneg %p355
        %p950 = pneg %p352
        %p951 = scmp.lt.s32.totalorder %s51, 1
        %s952 = scalar_select %p951, %s51, 1
        %s953 = scalar_lea.vmem %s12, %s952
        %p954 = pneg %p381
        %p955 = pneg %p378
        %s956 = sand.u32 %s46, 1
        %s957 = scalar_lea.sflag [#allocation9], %s956
        %s958 = sand.u32 %s394, 1
        %s959 = scalar_lea.vmem [#allocation10], %s958
        %p960 = pneg %p407
        %p961 = pneg %p404
        %s962 = sand.u32 %s46, 1
        %s963 = scalar_lea.sflag [#allocation12], %s962
        %s964 = sand.u32 %s420, 1
        %s965 = smul.addr %s964, 16
        %s966 = scalar_lea.vmem [#allocation11], %s965
        %p967 = pneg %p433
        %p968 = pneg %p430
        %p969 = scmp.lt.s32.totalorder %s51, 1
        %s970 = scalar_select %p969, %s51, 1
        %s971 = scalar_lea.vmem %s15, %s970
        %p972 = pneg %p459
        %p973 = pneg %p456
        %p974 = scmp.lt.s32.totalorder %s51, 1
        %s975 = scalar_select %p974, %s51, 1
        %s976 = smul.addr %s975, 8
        %s977 = smul.addr %s976, 4
        %s978 = scalar_lea.vmem %s16, %s977
        %p979 = pneg %p485
        %p980 = pneg %p482
        %p981 = scmp.lt.s32.totalorder %s51, 1
        %s982 = scalar_select %p981, %s51, 1
        %s983 = scalar_lea.vmem %s17, %s982
        %p984 = pneg %p511
        %p985 = pneg %p508
        %p986 = scmp.lt.s32.totalorder %s51, 1
        %s987 = scalar_select %p986, %s51, 1
        %s988 = scalar_lea.vmem %s18, %s987
        %p989 = pneg %p537
        %p990 = pneg %p534
        %s991 = sand.u32 %s46, 1
        %s992 = scalar_lea.sflag [#allocation12], %s991
        %s993 = sand.u32 %s550, 1
        %s994 = scalar_lea.vmem [#allocation13], %s993
        %p995 = pneg %p563
        %p996 = pneg %p560
        %p997 = pneg %p589
        %p998 = pneg %p586
        %s999 = sand.u32 %s576, 1
        %s1000 = scalar_lea.sflag [#allocation4], %s999
        %s1001 = sand.u32 %s576, 1
        %s1002 = smul.addr %s1001, 8
        %s1003 = scalar_lea.vmem [#allocation14], %s1002
        %p1004 = scmp.lt.s32.totalorder %s51, 1
        %s1005 = scalar_select %p1004, %s51, 1
        %s1006 = smul.addr %s1005, 4
        %s1007 = smul.addr %s1006, 4
        %s1008 = scalar_lea.vmem %s4, %s1007
        %p1009 = scmp.lt.s32.totalorder %s51, 1
        %s1010 = scalar_select %p1009, %s51, 1
        %s1011 = scalar_lea.vmem %s5, %s1010
        %p1012 = scmp.lt.s32.totalorder %s51, 1
        %s1013 = scalar_select %p1012, %s51, 1
        %s1014 = smul.addr %s1013, 4
        %s1015 = smul.addr %s1014, 4
        %s1016 = scalar_lea.vmem %s6, %s1015
        %p1017 = scmp.lt.s32.totalorder %s51, 1
        %s1018 = scalar_select %p1017, %s51, 1
        %s1019 = scalar_lea.vmem %s7, %s1018
        %p1020 = scmp.lt.s32.totalorder %s51, 1
        %s1021 = scalar_select %p1020, %s51, 1
        %s1022 = smul.addr %s1021, 4
        %s1023 = smul.addr %s1022, 4
        %s1024 = scalar_lea.vmem %s8, %s1023
        %p1025 = scmp.lt.s32.totalorder %s51, 1
        %s1026 = scalar_select %p1025, %s51, 1
        %s1027 = scalar_lea.vmem %s9, %s1026
        %p1028 = scmp.lt.s32.totalorder %s51, 1
        %s1029 = scalar_select %p1028, %s51, 1
        %s1030 = scalar_lea.vmem %s11, %s1029
        %p1031 = scmp.lt.s32.totalorder %s51, 1
        %s1032 = scalar_select %p1031, %s51, 1
        %s1033 = scalar_lea.vmem %s12, %s1032
        %p1034 = scmp.lt.s32.totalorder %s51, 1
        %s1035 = scalar_select %p1034, %s51, 1
        %s1036 = scalar_lea.vmem %s15, %s1035
        %p1037 = scmp.lt.s32.totalorder %s51, 1
        %s1038 = scalar_select %p1037, %s51, 1
        %s1039 = smul.addr %s1038, 8
        %s1040 = smul.addr %s1039, 4
        %s1041 = scalar_lea.vmem %s16, %s1040
        %p1042 = scmp.lt.s32.totalorder %s51, 1
        %s1043 = scalar_select %p1042, %s51, 1
        %s1044 = scalar_lea.vmem %s17, %s1043
        %p1045 = scmp.lt.s32.totalorder %s51, 1
        %s1046 = scalar_select %p1045, %s51, 1
        %s1047 = scalar_lea.vmem %s18, %s1046
        %p1049 = scmp.eq.s32.totalorder %s51, 0
        // Predicated region
        $region129: #{tpu_custom_call.1} parent=99 // pred_check
          %p1050 = pneg %p1049
        $region130: #{tpu_custom_call.1} parent=99 // pred_check_branch
          %1052 = sbr.rel (%p1050) target = $region132
        $region131: #{tpu_custom_call.1} parent=99 // pred_region
          %v1053 = vld [vmem:[%s828] sm:$0xff]
          %v1054 = vld [vmem:[%s2] sm:$0x1]
          %v1055 = vld [vmem:[#allocation7] sm:$0x1]
          %vm1056 = vcmask 261120
          %v1057 = vsel %vm1056, %v1053, 0.0
          %1058 = vadd.xlane.f32.xlu0 %v1057
          %v1059 = vpop.xlane.xlu0 %1058
          %v1060 = vrcp.pop 32.0
          %v1061 = vmul.f32 32.0, %v1060
          %v1062 = vsub.f32 1.0, %v1061
          %v1063 = vmul.f32 %v1060, %v1062
          %v1064 = vadd.f32 %v1060, %v1063
          %vm1065 = vweird.f32 %v1060
          %v1066 = vsel %vm1065, %v1060, %v1064
          %v1067 = vmul.f32 %v1059, %v1066
          %v1068 = vsub.f32 %v1053, %v1067
          %v1069 = vmul.f32 %v1068, %v1068
          %v1070 = vsel %vm1056, %v1069, 0.0
          %1071 = vadd.xlane.f32.xlu0 %v1070
          %v1072 = vpop.xlane.xlu0 %1071
          %v1073 = vmul.f32 %v1072, %v1066
          %v1074 = vadd.f32 %v1073, 1e-12
          %v1075 = vrsqrt.pop %v1074
          %v1076 = vmul.f32 %v1075, %v1074
          %v1077 = vmul.f32 %v1076, %v1075
          %v1078 = vmul.f32 0.5, %v1077
          %v1079 = vsub.f32 1.5, %v1078
          %v1080 = vmul.f32 %v1075, %v1079
          %vm1081 = vweird.f32 %v1074
          %vm1082 = vweird.f32 %v1075
          %vm1083 = vmor %vm1081, %vm1082
          %v1084 = vsel %vm1083, %v1075, %v1080
          %v1085 = vmul.f32 %v1068, %v1084
          %v1087 = vperm.slane %v1054, 0
          %v1089 = vmul.f32 %v1085, %v1087
          %v1091 = vperm.slane %v1055, 0
          %v1093 = vadd.f32 %v1089, %v1091
          %1094 = vst.msk [vmem:[%s1003] sm:$0xff] %vm1056, %v1093
        $region132: #{tpu_custom_call.1} parent=99 // pred_fallthru
          _
        %v1095 = vld [vmem:[%s1003] sm:$0xff]
        %v1096 = vld [vmem:[%s837] sm:$0x1]
        %v1097 = vpack.c.bf16 %v1095, %v1095
        %v1098 = vld [vmem:[%s1008] sm:$0xf]
        %v1099 = vld [vmem:[%s1008 + $0x4] sm:$0xf]
        %v1100 = vld [vmem:[%s1008 + $0x8] sm:$0xf]
        %v1101 = vld [vmem:[%s1008 + $0xc] sm:$0xf]
        %v1102 = vld [vmem:[%s1011] sm:$0x1]
        %v1104 = vperm.slane %v1102, 0
        %v1110 = vunpack.c.l.b16 %v1098
        %v1111 = vunpack.c.l.b16 %v1099
        %v1112 = vunpack.c.l.b16 %v1100
        %v1113 = vunpack.c.l.b16 %v1101
        %v1114 = vpack.c.b16 %v1111, %v1110
        %v1115 = vpack.c.b16 %v1113, %v1112
        %vm1118 = vcmask 261120
        %v1120 = vsel %vm1118, %v1097, 0
        %1122 = vmatpush.bf16.msra.mxu0 0
        %1123 = vmatpush.bf16.msra.mxu0 0
        %1124 = vmatpush.bf16.msra.mxu0 0
        %1125 = vmatpush.bf16.msra.mxu0 0
        %1126 = vmatpush.bf16.msra.mxu0 0
        %1127 = vmatpush.bf16.msra.mxu0 0
        %1128 = vmatpush.bf16.msra.mxu0 %v1115
        %1129 = vmatpush.bf16.msra.mxu0 %v1114
        %1130 = vmatmul.bf16.gmra.mxu0 %v1120
        %v1131 = vpop.f32.mrf.mxu0
        %v1132 = vadd.f32 %v1104, %v1131
        %v1133 = vpop.f32.mrf.mxu0
        %1134 = vdwg.mxu0
        %v1135 = vld [vmem:[%s1016] sm:$0xf]
        %v1136 = vld [vmem:[%s1016 + $0x4] sm:$0xf]
        %v1137 = vld [vmem:[%s1016 + $0x8] sm:$0xf]
        %v1138 = vld [vmem:[%s1016 + $0xc] sm:$0xf]
        %v1139 = vld [vmem:[%s1019] sm:$0x1]
        %v1141 = vperm.slane %v1139, 0
        %v1147 = vunpack.c.l.b16 %v1135
        %v1148 = vunpack.c.l.b16 %v1136
        %v1149 = vunpack.c.l.b16 %v1137
        %v1150 = vunpack.c.l.b16 %v1138
        %v1151 = vpack.c.b16 %v1148, %v1147
        %v1152 = vpack.c.b16 %v1150, %v1149
        %1155 = vmatpush.bf16.msra.mxu0 0
        %1156 = vmatpush.bf16.msra.mxu0 0
        %1157 = vmatpush.bf16.msra.mxu0 0
        %1158 = vmatpush.bf16.msra.mxu0 0
        %1159 = vmatpush.bf16.msra.mxu0 0
        %1160 = vmatpush.bf16.msra.mxu0 0
        %1161 = vmatpush.bf16.msra.mxu0 %v1152
        %1162 = vmatpush.bf16.msra.mxu0 %v1151
        %1163 = vmatmul.bf16.gmra.mxu0 %v1120
        %v1164 = vpop.f32.mrf.mxu0
        %v1165 = vadd.f32 %v1141, %v1164
        %v1166 = vpop.f32.mrf.mxu0
        %1167 = vdwg.mxu0
        %v1168 = vld [vmem:[%s1024] sm:$0xf]
        %v1169 = vld [vmem:[%s1024 + $0x4] sm:$0xf]
        %v1170 = vld [vmem:[%s1024 + $0x8] sm:$0xf]
        %v1171 = vld [vmem:[%s1024 + $0xc] sm:$0xf]
        %v1172 = vld [vmem:[%s1027] sm:$0x1]
        %v1174 = vperm.slane %v1172, 0
        %v1180 = vunpack.c.l.b16 %v1168
        %v1181 = vunpack.c.l.b16 %v1169
        %v1182 = vunpack.c.l.b16 %v1170
        %v1183 = vunpack.c.l.b16 %v1171
        %v1184 = vpack.c.b16 %v1181, %v1180
        %v1185 = vpack.c.b16 %v1183, %v1182
        %1188 = vmatpush.bf16.msra.mxu0 0
        %1189 = vmatpush.bf16.msra.mxu0 0
        %1190 = vmatpush.bf16.msra.mxu0 0
        %1191 = vmatpush.bf16.msra.mxu0 0
        %1192 = vmatpush.bf16.msra.mxu0 0
        %1193 = vmatpush.bf16.msra.mxu0 0
        %1194 = vmatpush.bf16.msra.mxu0 %v1185
        %1195 = vmatpush.bf16.msra.mxu0 %v1184
        %1196 = vmatmul.bf16.gmra.mxu0 %v1120
        %v1197 = vpop.f32.mrf.mxu0
        %v1198 = vadd.f32 %v1174, %v1197
        %v1199 = vpop.f32.mrf.mxu0
        %1200 = vdwg.mxu0
        %v1201 = vmul.f32 %v1132, 0.35355338
        %1203 = vrot.lane.b32.xlu0 %v1201, 120
        %v1204 = vpop.permute.xlu0 %1203
        %1206 = vrot.lane.b32.xlu0 %v1201, 112
        %v1207 = vpop.permute.xlu0 %1206
        %1209 = vrot.lane.b32.xlu0 %v1201, 104
        %v1210 = vpop.permute.xlu0 %1209
        %v1212 = vrot.slane %v1207, 4
        %vm1213 = vcmask 1047556
        %v1214 = vsel %vm1213, %v1212, %v1201
        %v1215 = vrot.slane %v1201, 4
        %v1216 = vsel %vm1213, %v1207, %v1215
        %v1218 = vunpack.c.l.s4 1983009808
        %v1219 = vunpack.c.0.s8 %v1218
        %v1220 = vperm.slane %v1214, %v1219
        %v1222 = vunpack.c.l.s4 1983009808
        %v1223 = vunpack.c.0.s8 %v1222
        %v1224 = vperm.slane %v1216, %v1223
        %v1225 = vrot.slane %v1210, 4
        %v1226 = vsel %vm1213, %v1225, %v1204
        %v1227 = vrot.slane %v1204, 4
        %v1228 = vsel %vm1213, %v1210, %v1227
        %v1230 = vunpack.c.l.s4 1983009808
        %v1231 = vunpack.c.0.s8 %v1230
        %v1232 = vperm.slane %v1226, %v1231
        %v1234 = vunpack.c.l.s4 1983009808
        %v1235 = vunpack.c.0.s8 %v1234
        %v1236 = vperm.slane %v1228, %v1235
        %v1237 = vrot.slane %v1232, 4
        %v1238 = vsel %vm1213, %v1237, %v1220
        %v1239 = vrot.slane %v1220, 4
        %v1240 = vsel %vm1213, %v1232, %v1239
        %v1242 = vunpack.c.l.s4 1934713408
        %v1243 = vunpack.c.0.s8 %v1242
        %v1244 = vperm.slane %v1238, %v1243
        %v1246 = vunpack.c.l.s4 1934713408
        %v1247 = vunpack.c.0.s8 %v1246
        %v1248 = vperm.slane %v1240, %v1247
        %v1249 = vrot.slane %v1236, 4
        %v1250 = vsel %vm1213, %v1249, %v1224
        %v1251 = vrot.slane %v1224, 4
        %v1252 = vsel %vm1213, %v1236, %v1251
        %v1254 = vunpack.c.l.s4 1934713408
        %v1255 = vunpack.c.0.s8 %v1254
        %v1256 = vperm.slane %v1250, %v1255
        %v1258 = vunpack.c.l.s4 1934713408
        %v1259 = vunpack.c.0.s8 %v1258
        %v1260 = vperm.slane %v1252, %v1259
        %v1261 = vrot.slane %v1244, 4
        %v1262 = vsel %vm1213, 0.0, %v1261
        %v1263 = vrot.slane %v1248, 4
        %v1264 = vsel %vm1213, 0.0, %v1263
        %v1265 = vrot.slane %v1256, 4
        %v1266 = vsel %vm1213, 0.0, %v1265
        %v1267 = vrot.slane %v1260, 4
        %v1268 = vsel %vm1213, 0.0, %v1267
        %v1269 = vsel %vm1213, %v1263, %v1244
        %v1271 = vunpack.c.l.s4 1983009808
        %v1272 = vunpack.c.0.s8 %v1271
        %v1273 = vperm.slane %v1269, %v1272
        %v1274 = vrot.slane %v1264, 4
        %v1275 = vsel %vm1213, %v1274, %v1262
        %v1277 = vunpack.c.l.s4 1983009808
        %v1278 = vunpack.c.0.s8 %v1277
        %v1279 = vperm.slane %v1275, %v1278
        %v1280 = vsel %vm1213, %v1267, %v1256
        %v1282 = vunpack.c.l.s4 1983009808
        %v1283 = vunpack.c.0.s8 %v1282
        %v1284 = vperm.slane %v1280, %v1283
        %v1285 = vrot.slane %v1268, 4
        %v1286 = vsel %vm1213, %v1285, %v1266
        %v1288 = vunpack.c.l.s4 1983009808
        %v1289 = vunpack.c.0.s8 %v1288
        %v1290 = vperm.slane %v1286, %v1289
        %v1291 = vrot.slane %v1279, 4
        %v1292 = vsel %vm1213, %v1291, %v1273
        %v1293 = vrot.slane %v1273, 4
        %v1294 = vsel %vm1213, %v1279, %v1293
        %v1296 = vunpack.c.l.s4 1934713408
        %v1297 = vunpack.c.0.s8 %v1296
        %v1298 = vperm.slane %v1292, %v1297
        %v1300 = vunpack.c.l.s4 1934713408
        %v1301 = vunpack.c.0.s8 %v1300
        %v1302 = vperm.slane %v1294, %v1301
        %v1303 = vrot.slane %v1290, 4
        %v1304 = vsel %vm1213, %v1303, %v1284
        %v1305 = vrot.slane %v1284, 4
        %v1306 = vsel %vm1213, %v1290, %v1305
        %v1308 = vunpack.c.l.s4 1934713408
        %v1309 = vunpack.c.0.s8 %v1308
        %v1310 = vperm.slane %v1304, %v1309
        %v1312 = vunpack.c.l.s4 1934713408
        %v1313 = vunpack.c.0.s8 %v1312
        %v1314 = vperm.slane %v1306, %v1313
        %v1315 = vrot.slane %v1310, 4
        %v1316 = vsel %vm1213, %v1315, %v1298
        %v1317 = vrot.slane %v1298, 4
        %v1318 = vsel %vm1213, %v1310, %v1317
        %v1319 = vrot.slane %v1314, 4
        %v1320 = vsel %vm1213, %v1319, %v1302
        %v1321 = vrot.slane %v1302, 4
        %v1322 = vsel %vm1213, %v1314, %v1321
        %1324 = vrot.lane.b32.xlu0 %v1165, 120
        %v1325 = vpop.permute.xlu0 %1324
        %1327 = vrot.lane.b32.xlu0 %v1165, 112
        %v1328 = vpop.permute.xlu0 %1327
        %1330 = vrot.lane.b32.xlu0 %v1165, 104
        %v1331 = vpop.permute.xlu0 %1330
        %v1333 = vrot.slane %v1328, 4
        %v1334 = vsel %vm1213, %v1333, %v1165
        %v1335 = vrot.slane %v1165, 4
        %v1336 = vsel %vm1213, %v1328, %v1335
        %v1338 = vunpack.c.l.s4 1983009808
        %v1339 = vunpack.c.0.s8 %v1338
        %v1340 = vperm.slane %v1334, %v1339
        %v1342 = vunpack.c.l.s4 1983009808
        %v1343 = vunpack.c.0.s8 %v1342
        %v1344 = vperm.slane %v1336, %v1343
        %v1345 = vrot.slane %v1331, 4
        %v1346 = vsel %vm1213, %v1345, %v1325
        %v1347 = vrot.slane %v1325, 4
        %v1348 = vsel %vm1213, %v1331, %v1347
        %v1350 = vunpack.c.l.s4 1983009808
        %v1351 = vunpack.c.0.s8 %v1350
        %v1352 = vperm.slane %v1346, %v1351
        %v1354 = vunpack.c.l.s4 1983009808
        %v1355 = vunpack.c.0.s8 %v1354
        %v1356 = vperm.slane %v1348, %v1355
        %v1357 = vrot.slane %v1352, 4
        %v1358 = vsel %vm1213, %v1357, %v1340
        %v1359 = vrot.slane %v1340, 4
        %v1360 = vsel %vm1213, %v1352, %v1359
        %v1362 = vunpack.c.l.s4 1934713408
        %v1363 = vunpack.c.0.s8 %v1362
        %v1364 = vperm.slane %v1358, %v1363
        %v1366 = vunpack.c.l.s4 1934713408
        %v1367 = vunpack.c.0.s8 %v1366
        %v1368 = vperm.slane %v1360, %v1367
        %v1369 = vrot.slane %v1356, 4
        %v1370 = vsel %vm1213, %v1369, %v1344
        %v1371 = vrot.slane %v1344, 4
        %v1372 = vsel %vm1213, %v1356, %v1371
        %v1374 = vunpack.c.l.s4 1934713408
        %v1375 = vunpack.c.0.s8 %v1374
        %v1376 = vperm.slane %v1370, %v1375
        %v1378 = vunpack.c.l.s4 1934713408
        %v1379 = vunpack.c.0.s8 %v1378
        %v1380 = vperm.slane %v1372, %v1379
        %v1381 = vrot.slane %v1364, 4
        %v1382 = vsel %vm1213, 0.0, %v1381
        %v1383 = vrot.slane %v1368, 4
        %v1384 = vsel %vm1213, 0.0, %v1383
        %v1385 = vrot.slane %v1376, 4
        %v1386 = vsel %vm1213, 0.0, %v1385
        %v1387 = vrot.slane %v1380, 4
        %v1388 = vsel %vm1213, 0.0, %v1387
        %v1389 = vsel %vm1213, %v1383, %v1364
        %v1391 = vunpack.c.l.s4 1983009808
        %v1392 = vunpack.c.0.s8 %v1391
        %v1393 = vperm.slane %v1389, %v1392
        %v1394 = vrot.slane %v1384, 4
        %v1395 = vsel %vm1213, %v1394, %v1382
        %v1397 = vunpack.c.l.s4 1983009808
        %v1398 = vunpack.c.0.s8 %v1397
        %v1399 = vperm.slane %v1395, %v1398
        %v1400 = vsel %vm1213, %v1387, %v1376
        %v1402 = vunpack.c.l.s4 1983009808
        %v1403 = vunpack.c.0.s8 %v1402
        %v1404 = vperm.slane %v1400, %v1403
        %v1405 = vrot.slane %v1388, 4
        %v1406 = vsel %vm1213, %v1405, %v1386
        %v1408 = vunpack.c.l.s4 1983009808
        %v1409 = vunpack.c.0.s8 %v1408
        %v1410 = vperm.slane %v1406, %v1409
        %v1411 = vrot.slane %v1399, 4
        %v1412 = vsel %vm1213, %v1411, %v1393
        %v1413 = vrot.slane %v1393, 4
        %v1414 = vsel %vm1213, %v1399, %v1413
        %v1416 = vunpack.c.l.s4 1934713408
        %v1417 = vunpack.c.0.s8 %v1416
        %v1418 = vperm.slane %v1412, %v1417
        %v1420 = vunpack.c.l.s4 1934713408
        %v1421 = vunpack.c.0.s8 %v1420
        %v1422 = vperm.slane %v1414, %v1421
        %v1423 = vrot.slane %v1410, 4
        %v1424 = vsel %vm1213, %v1423, %v1404
        %v1425 = vrot.slane %v1404, 4
        %v1426 = vsel %vm1213, %v1410, %v1425
        %v1428 = vunpack.c.l.s4 1934713408
        %v1429 = vunpack.c.0.s8 %v1428
        %v1430 = vperm.slane %v1424, %v1429
        %v1432 = vunpack.c.l.s4 1934713408
        %v1433 = vunpack.c.0.s8 %v1432
        %v1434 = vperm.slane %v1426, %v1433
        %v1435 = vrot.slane %v1430, 4
        %v1436 = vsel %vm1213, %v1435, %v1418
        %v1437 = vrot.slane %v1418, 4
        %v1438 = vsel %vm1213, %v1430, %v1437
        %v1439 = vrot.slane %v1434, 4
        %v1440 = vsel %vm1213, %v1439, %v1422
        %v1441 = vrot.slane %v1422, 4
        %v1442 = vsel %vm1213, %v1434, %v1441
        %1444 = vrot.lane.b32.xlu0 %v1198, 120
        %v1445 = vpop.permute.xlu0 %1444
        %1447 = vrot.lane.b32.xlu0 %v1198, 112
        %v1448 = vpop.permute.xlu0 %1447
        %1450 = vrot.lane.b32.xlu0 %v1198, 104
        %v1451 = vpop.permute.xlu0 %1450
        %v1453 = vrot.slane %v1448, 4
        %v1454 = vsel %vm1213, %v1453, %v1198
        %v1455 = vrot.slane %v1198, 4
        %v1456 = vsel %vm1213, %v1448, %v1455
        %v1458 = vunpack.c.l.s4 1983009808
        %v1459 = vunpack.c.0.s8 %v1458
        %v1460 = vperm.slane %v1454, %v1459
        %v1462 = vunpack.c.l.s4 1983009808
        %v1463 = vunpack.c.0.s8 %v1462
        %v1464 = vperm.slane %v1456, %v1463
        %v1465 = vrot.slane %v1451, 4
        %v1466 = vsel %vm1213, %v1465, %v1445
        %v1467 = vrot.slane %v1445, 4
        %v1468 = vsel %vm1213, %v1451, %v1467
        %v1470 = vunpack.c.l.s4 1983009808
        %v1471 = vunpack.c.0.s8 %v1470
        %v1472 = vperm.slane %v1466, %v1471
        %v1474 = vunpack.c.l.s4 1983009808
        %v1475 = vunpack.c.0.s8 %v1474
        %v1476 = vperm.slane %v1468, %v1475
        %v1477 = vrot.slane %v1472, 4
        %v1478 = vsel %vm1213, %v1477, %v1460
        %v1479 = vrot.slane %v1460, 4
        %v1480 = vsel %vm1213, %v1472, %v1479
        %v1482 = vunpack.c.l.s4 1934713408
        %v1483 = vunpack.c.0.s8 %v1482
        %v1484 = vperm.slane %v1478, %v1483
        %v1486 = vunpack.c.l.s4 1934713408
        %v1487 = vunpack.c.0.s8 %v1486
        %v1488 = vperm.slane %v1480, %v1487
        %v1489 = vrot.slane %v1476, 4
        %v1490 = vsel %vm1213, %v1489, %v1464
        %v1491 = vrot.slane %v1464, 4
        %v1492 = vsel %vm1213, %v1476, %v1491
        %v1494 = vunpack.c.l.s4 1934713408
        %v1495 = vunpack.c.0.s8 %v1494
        %v1496 = vperm.slane %v1490, %v1495
        %v1498 = vunpack.c.l.s4 1934713408
        %v1499 = vunpack.c.0.s8 %v1498
        %v1500 = vperm.slane %v1492, %v1499
        %v1501 = vrot.slane %v1484, 4
        %v1502 = vsel %vm1213, 0.0, %v1501
        %v1503 = vrot.slane %v1488, 4
        %v1504 = vsel %vm1213, 0.0, %v1503
        %v1505 = vrot.slane %v1496, 4
        %v1506 = vsel %vm1213, 0.0, %v1505
        %v1507 = vrot.slane %v1500, 4
        %v1508 = vsel %vm1213, 0.0, %v1507
        %v1509 = vsel %vm1213, %v1503, %v1484
        %v1511 = vunpack.c.l.s4 1983009808
        %v1512 = vunpack.c.0.s8 %v1511
        %v1513 = vperm.slane %v1509, %v1512
        %v1514 = vrot.slane %v1504, 4
        %v1515 = vsel %vm1213, %v1514, %v1502
        %v1517 = vunpack.c.l.s4 1983009808
        %v1518 = vunpack.c.0.s8 %v1517
        %v1519 = vperm.slane %v1515, %v1518
        %v1520 = vsel %vm1213, %v1507, %v1496
        %v1522 = vunpack.c.l.s4 1983009808
        %v1523 = vunpack.c.0.s8 %v1522
        %v1524 = vperm.slane %v1520, %v1523
        %v1525 = vrot.slane %v1508, 4
        %v1526 = vsel %vm1213, %v1525, %v1506
        %v1528 = vunpack.c.l.s4 1983009808
        %v1529 = vunpack.c.0.s8 %v1528
        %v1530 = vperm.slane %v1526, %v1529
        %v1531 = vrot.slane %v1519, 4
        %v1532 = vsel %vm1213, %v1531, %v1513
        %v1533 = vrot.slane %v1513, 4
        %v1534 = vsel %vm1213, %v1519, %v1533
        %v1536 = vunpack.c.l.s4 1934713408
        %v1537 = vunpack.c.0.s8 %v1536
        %v1538 = vperm.slane %v1532, %v1537
        %v1540 = vunpack.c.l.s4 1934713408
        %v1541 = vunpack.c.0.s8 %v1540
        %v1542 = vperm.slane %v1534, %v1541
        %v1543 = vrot.slane %v1530, 4
        %v1544 = vsel %vm1213, %v1543, %v1524
        %v1545 = vrot.slane %v1524, 4
        %v1546 = vsel %vm1213, %v1530, %v1545
        %v1548 = vunpack.c.l.s4 1934713408
        %v1549 = vunpack.c.0.s8 %v1548
        %v1550 = vperm.slane %v1544, %v1549
        %v1552 = vunpack.c.l.s4 1934713408
        %v1553 = vunpack.c.0.s8 %v1552
        %v1554 = vperm.slane %v1546, %v1553
        %v1555 = vrot.slane %v1550, 4
        %v1556 = vsel %vm1213, %v1555, %v1538
        %v1557 = vrot.slane %v1538, 4
        %v1558 = vsel %vm1213, %v1550, %v1557
        %v1559 = vrot.slane %v1554, 4
        %v1560 = vsel %vm1213, %v1559, %v1542
        %v1561 = vrot.slane %v1542, 4
        %v1562 = vsel %vm1213, %v1554, %v1561
        %v1563 = vpack.c.bf16 %v1316, %v1316
        %v1564 = vpack.c.bf16 %v1318, %v1318
        %v1565 = vpack.c.bf16 %v1320, %v1320
        %v1566 = vpack.c.bf16 %v1322, %v1322
        %v1567 = vpack.c.bf16 %v1436, %v1436
        %v1568 = vpack.c.bf16 %v1438, %v1438
        %v1569 = vpack.c.bf16 %v1440, %v1440
        %v1570 = vpack.c.bf16 %v1442, %v1442
        %v1572 = vperm.slane %v1096, 0
        %vm1574 = vcmask 64512
        %v1576 = vsel %vm1574, %v1563, 0
        %v1579 = vsel %vm1574, %v1567, 0
        %1581 = vmatpush.bf16.xpose.msra.mxu0 0
        %1582 = vmatpush.bf16.xpose.msra.mxu0 0
        %1583 = vmatpush.bf16.xpose.msra.mxu0 0
        %1584 = vmatpush.bf16.xpose.msra.mxu0 0
        %1585 = vmatpush.bf16.xpose.msra.mxu0 0
        %1586 = vmatpush.bf16.xpose.msra.mxu0 0
        %1587 = vmatpush.bf16.xpose.msra.mxu0 0
        %1588 = vmatpush.bf16.xpose.msra.mxu0 %v1579
        %1589 = vmatmul.bf16.gmra.mxu0 %v1576
        %v1590 = vpop.f32.mrf.mxu0
        %v1591 = vadd.f32 %v1572, %v1590
        %v1592 = vpop.f32.mrf.mxu0
        %1593 = vdwg.mxu0
        %v1595 = vsel %vm1574, %v1564, 0
        %v1598 = vsel %vm1574, %v1568, 0
        %1600 = vmatpush.bf16.xpose.msra.mxu0 0
        %1601 = vmatpush.bf16.xpose.msra.mxu0 0
        %1602 = vmatpush.bf16.xpose.msra.mxu0 0
        %1603 = vmatpush.bf16.xpose.msra.mxu0 0
        %1604 = vmatpush.bf16.xpose.msra.mxu0 0
        %1605 = vmatpush.bf16.xpose.msra.mxu0 0
        %1606 = vmatpush.bf16.xpose.msra.mxu0 0
        %1607 = vmatpush.bf16.xpose.msra.mxu0 %v1598
        %1608 = vmatmul.bf16.gmra.mxu0 %v1595
        %v1609 = vpop.f32.mrf.mxu0
        %v1610 = vadd.f32 %v1572, %v1609
        %v1611 = vpop.f32.mrf.mxu0
        %1612 = vdwg.mxu0
        %v1614 = vsel %vm1574, %v1565, 0
        %v1617 = vsel %vm1574, %v1569, 0
        %1619 = vmatpush.bf16.xpose.msra.mxu0 0
        %1620 = vmatpush.bf16.xpose.msra.mxu0 0
        %1621 = vmatpush.bf16.xpose.msra.mxu0 0
        %1622 = vmatpush.bf16.xpose.msra.mxu0 0
        %1623 = vmatpush.bf16.xpose.msra.mxu0 0
        %1624 = vmatpush.bf16.xpose.msra.mxu0 0
        %1625 = vmatpush.bf16.xpose.msra.mxu0 0
        %1626 = vmatpush.bf16.xpose.msra.mxu0 %v1617
        %1627 = vmatmul.bf16.gmra.mxu0 %v1614
        %v1628 = vpop.f32.mrf.mxu0
        %v1629 = vadd.f32 %v1572, %v1628
        %v1630 = vpop.f32.mrf.mxu0
        %1631 = vdwg.mxu0
        %v1633 = vsel %vm1574, %v1566, 0
        %v1636 = vsel %vm1574, %v1570, 0
        %1638 = vmatpush.bf16.xpose.msra.mxu0 0
        %1639 = vmatpush.bf16.xpose.msra.mxu0 0
        %1640 = vmatpush.bf16.xpose.msra.mxu0 0
        %1641 = vmatpush.bf16.xpose.msra.mxu0 0
        %1642 = vmatpush.bf16.xpose.msra.mxu0 0
        %1643 = vmatpush.bf16.xpose.msra.mxu0 0
        %1644 = vmatpush.bf16.xpose.msra.mxu0 0
        %1645 = vmatpush.bf16.xpose.msra.mxu0 %v1636
        %1646 = vmatmul.bf16.gmra.mxu0 %v1633
        %v1647 = vpop.f32.mrf.mxu0
        %v1648 = vadd.f32 %v1572, %v1647
        %v1649 = vpop.f32.mrf.mxu0
        %1650 = vdwg.mxu0
        %v1651 = vsel %vm1574, %v1591, -inf
        %1652 = vmax.xlane.f32.xlu0 %v1651
        %v1653 = vpop.xlane.xlu0 %1652
        %v1654 = vsel %vm1574, %v1610, -inf
        %1655 = vmax.xlane.f32.xlu0 %v1654
        %v1656 = vpop.xlane.xlu0 %1655
        %v1657 = vsel %vm1574, %v1629, -inf
        %1658 = vmax.xlane.f32.xlu0 %v1657
        %v1659 = vpop.xlane.xlu0 %1658
        %v1660 = vsel %vm1574, %v1648, -inf
        %1661 = vmax.xlane.f32.xlu0 %v1660
        %v1662 = vpop.xlane.xlu0 %1661
        %v1663 = vsub.f32 %v1591, %v1653
        %v1664 = vsub.f32 %v1610, %v1656
        %v1665 = vsub.f32 %v1629, %v1659
        %v1666 = vsub.f32 %v1648, %v1662
        %v1667 = vmul.f32 %v1663, 1.442695
        %v1668 = vpow.pop %v1667
        %v1669 = vmul.f32 %v1664, 1.442695
        %v1670 = vpow.pop %v1669
        %v1671 = vmul.f32 %v1665, 1.442695
        %v1672 = vpow.pop %v1671
        %v1673 = vmul.f32 %v1666, 1.442695
        %v1674 = vpow.pop %v1673
        %v1675 = vsel %vm1574, %v1668, 0.0
        %1676 = vadd.xlane.f32.xlu0 %v1675
        %v1677 = vpop.xlane.xlu0 %1676
        %v1678 = vsel %vm1574, %v1670, 0.0
        %1679 = vadd.xlane.f32.xlu0 %v1678
        %v1680 = vpop.xlane.xlu0 %1679
        %v1681 = vsel %vm1574, %v1672, 0.0
        %1682 = vadd.xlane.f32.xlu0 %v1681
        %v1683 = vpop.xlane.xlu0 %1682
        %v1684 = vsel %vm1574, %v1674, 0.0
        %1685 = vadd.xlane.f32.xlu0 %v1684
        %v1686 = vpop.xlane.xlu0 %1685
        %v1687 = vrcp.pop %v1677
        %v1688 = vrcp.pop %v1680
        %v1689 = vrcp.pop %v1683
        %v1690 = vrcp.pop %v1686
        %v1691 = vmul.f32 %v1668, %v1687
        %v1692 = vmul.f32 %v1670, %v1688
        %v1693 = vmul.f32 %v1672, %v1689
        %v1694 = vmul.f32 %v1674, %v1690
        %v1695 = vpack.c.bf16 %v1691, %v1691
        %v1696 = vpack.c.bf16 %v1692, %v1692
        %v1697 = vpack.c.bf16 %v1693, %v1693
        %v1698 = vpack.c.bf16 %v1694, %v1694
        %v1699 = vpack.c.bf16 %v1556, %v1556
        %v1700 = vpack.c.bf16 %v1558, %v1558
        %v1701 = vpack.c.bf16 %v1560, %v1560
        %v1702 = vpack.c.bf16 %v1562, %v1562
        %v1704 = vsel %vm1574, %v1695, 0
        %vm1706 = vcmask 1043456
        %v1708 = vsel %vm1706, %v1699, 0
        %1710 = vmatpush.bf16.msra.mxu0 0
        %1711 = vmatpush.bf16.msra.mxu0 0
        %1712 = vmatpush.bf16.msra.mxu0 0
        %1713 = vmatpush.bf16.msra.mxu0 0
        %1714 = vmatpush.bf16.msra.mxu0 0
        %1715 = vmatpush.bf16.msra.mxu0 0
        %1716 = vmatpush.bf16.msra.mxu0 0
        %1717 = vmatpush.bf16.msra.mxu0 %v1708
        %1718 = vmatmul.bf16.gmra.mxu0 %v1704
        %v1719 = vpop.f32.mrf.mxu0
        %v1720 = vadd.f32 0.0, %v1719
        %v1721 = vpop.f32.mrf.mxu0
        %1722 = vdwg.mxu0
        %v1724 = vsel %vm1574, %v1696, 0
        %v1727 = vsel %vm1706, %v1700, 0
        %1729 = vmatpush.bf16.msra.mxu0 0
        %1730 = vmatpush.bf16.msra.mxu0 0
        %1731 = vmatpush.bf16.msra.mxu0 0
        %1732 = vmatpush.bf16.msra.mxu0 0
        %1733 = vmatpush.bf16.msra.mxu0 0
        %1734 = vmatpush.bf16.msra.mxu0 0
        %1735 = vmatpush.bf16.msra.mxu0 0
        %1736 = vmatpush.bf16.msra.mxu0 %v1727
        %1737 = vmatmul.bf16.gmra.mxu0 %v1724
        %v1738 = vpop.f32.mrf.mxu0
        %v1739 = vadd.f32 0.0, %v1738
        %v1740 = vpop.f32.mrf.mxu0
        %1741 = vdwg.mxu0
        %v1743 = vsel %vm1574, %v1697, 0
        %v1746 = vsel %vm1706, %v1701, 0
        %1748 = vmatpush.bf16.msra.mxu0 0
        %1749 = vmatpush.bf16.msra.mxu0 0
        %1750 = vmatpush.bf16.msra.mxu0 0
        %1751 = vmatpush.bf16.msra.mxu0 0
        %1752 = vmatpush.bf16.msra.mxu0 0
        %1753 = vmatpush.bf16.msra.mxu0 0
        %1754 = vmatpush.bf16.msra.mxu0 0
        %1755 = vmatpush.bf16.msra.mxu0 %v1746
        %1756 = vmatmul.bf16.gmra.mxu0 %v1743
        %v1757 = vpop.f32.mrf.mxu0
        %v1758 = vadd.f32 0.0, %v1757
        %v1759 = vpop.f32.mrf.mxu0
        %1760 = vdwg.mxu0
        %v1762 = vsel %vm1574, %v1698, 0
        %v1765 = vsel %vm1706, %v1702, 0
        %1767 = vmatpush.bf16.msra.mxu0 0
        %1768 = vmatpush.bf16.msra.mxu0 0
        %1769 = vmatpush.bf16.msra.mxu0 0
        %1770 = vmatpush.bf16.msra.mxu0 0
        %1771 = vmatpush.bf16.msra.mxu0 0
        %1772 = vmatpush.bf16.msra.mxu0 0
        %1773 = vmatpush.bf16.msra.mxu0 0
        %1774 = vmatpush.bf16.msra.mxu0 %v1765
        %1775 = vmatmul.bf16.gmra.mxu0 %v1762
        %v1776 = vpop.f32.mrf.mxu0
        %v1777 = vadd.f32 0.0, %v1776
        %v1778 = vpop.f32.mrf.mxu0
        %1779 = vdwg.mxu0
        %v1780 = vrot.slane %v1758, 4
        %v1781 = vsel %vm1213, %v1780, %v1720
        %v1782 = vrot.slane %v1720, 4
        %v1783 = vsel %vm1213, %v1758, %v1782
        %v1785 = vunpack.c.l.s4 1983009808
        %v1786 = vunpack.c.0.s8 %v1785
        %v1787 = vperm.slane %v1781, %v1786
        %v1789 = vunpack.c.l.s4 1983009808
        %v1790 = vunpack.c.0.s8 %v1789
        %v1791 = vperm.slane %v1783, %v1790
        %v1792 = vrot.slane %v1777, 4
        %v1793 = vsel %vm1213, %v1792, %v1739
        %v1794 = vrot.slane %v1739, 4
        %v1795 = vsel %vm1213, %v1777, %v1794
        %v1797 = vunpack.c.l.s4 1983009808
        %v1798 = vunpack.c.0.s8 %v1797
        %v1799 = vperm.slane %v1793, %v1798
        %v1801 = vunpack.c.l.s4 1983009808
        %v1802 = vunpack.c.0.s8 %v1801
        %v1803 = vperm.slane %v1795, %v1802
        %v1804 = vrot.slane %v1799, 4
        %v1805 = vsel %vm1213, %v1804, %v1787
        %v1806 = vrot.slane %v1787, 4
        %v1807 = vsel %vm1213, %v1799, %v1806
        %v1809 = vunpack.c.l.s4 1934713408
        %v1810 = vunpack.c.0.s8 %v1809
        %v1811 = vperm.slane %v1805, %v1810
        %v1813 = vunpack.c.l.s4 1934713408
        %v1814 = vunpack.c.0.s8 %v1813
        %v1815 = vperm.slane %v1807, %v1814
        %v1816 = vrot.slane %v1803, 4
        %v1817 = vsel %vm1213, %v1816, %v1791
        %v1818 = vrot.slane %v1791, 4
        %v1819 = vsel %vm1213, %v1803, %v1818
        %v1821 = vunpack.c.l.s4 1934713408
        %v1822 = vunpack.c.0.s8 %v1821
        %v1823 = vperm.slane %v1817, %v1822
        %v1825 = vunpack.c.l.s4 1934713408
        %v1826 = vunpack.c.0.s8 %v1825
        %v1827 = vperm.slane %v1819, %v1826
        %v1828 = vrot.slane %v1811, 4
        %v1829 = vsel %vm1213, 0.0, %v1828
        %v1830 = vrot.slane %v1815, 4
        %v1831 = vsel %vm1213, 0.0, %v1830
        %v1832 = vrot.slane %v1823, 4
        %v1833 = vsel %vm1213, 0.0, %v1832
        %v1834 = vrot.slane %v1827, 4
        %v1835 = vsel %vm1213, 0.0, %v1834
        %v1836 = vsel %vm1213, %v1830, %v1811
        %v1838 = vunpack.c.l.s4 1983009808
        %v1839 = vunpack.c.0.s8 %v1838
        %v1840 = vperm.slane %v1836, %v1839
        %v1841 = vrot.slane %v1831, 4
        %v1842 = vsel %vm1213, %v1841, %v1829
        %v1844 = vunpack.c.l.s4 1983009808
        %v1845 = vunpack.c.0.s8 %v1844
        %v1846 = vperm.slane %v1842, %v1845
        %v1847 = vsel %vm1213, %v1834, %v1823
        %v1849 = vunpack.c.l.s4 1983009808
        %v1850 = vunpack.c.0.s8 %v1849
        %v1851 = vperm.slane %v1847, %v1850
        %v1852 = vrot.slane %v1835, 4
        %v1853 = vsel %vm1213, %v1852, %v1833
        %v1855 = vunpack.c.l.s4 1983009808
        %v1856 = vunpack.c.0.s8 %v1855
        %v1857 = vperm.slane %v1853, %v1856
        %v1858 = vrot.slane %v1846, 4
        %v1859 = vsel %vm1213, %v1858, %v1840
        %v1860 = vrot.slane %v1840, 4
        %v1861 = vsel %vm1213, %v1846, %v1860
        %v1863 = vunpack.c.l.s4 1934713408
        %v1864 = vunpack.c.0.s8 %v1863
        %v1865 = vperm.slane %v1859, %v1864
        %v1867 = vunpack.c.l.s4 1934713408
        %v1868 = vunpack.c.0.s8 %v1867
        %v1869 = vperm.slane %v1861, %v1868
        %v1870 = vrot.slane %v1857, 4
        %v1871 = vsel %vm1213, %v1870, %v1851
        %v1872 = vrot.slane %v1851, 4
        %v1873 = vsel %vm1213, %v1857, %v1872
        %v1875 = vunpack.c.l.s4 1934713408
        %v1876 = vunpack.c.0.s8 %v1875
        %v1877 = vperm.slane %v1871, %v1876
        %v1879 = vunpack.c.l.s4 1934713408
        %v1880 = vunpack.c.0.s8 %v1879
        %v1881 = vperm.slane %v1873, %v1880
        %v1882 = vrot.slane %v1877, 4
        %v1883 = vsel %vm1213, %v1882, %v1865
        %v1884 = vrot.slane %v1865, 4
        %v1885 = vsel %vm1213, %v1877, %v1884
        %v1886 = vrot.slane %v1881, 4
        %v1887 = vsel %vm1213, %v1886, %v1869
        %v1888 = vrot.slane %v1869, 4
        %v1889 = vsel %vm1213, %v1881, %v1888
        %1891 = vrot.lane.b32.xlu0 %v1885, 8
        %v1892 = vpop.permute.xlu0 %1891
        %1895 = vrot.lane.b32.xlu0 %v1887, 16
        %v1896 = vpop.permute.xlu0 %1895
        %1899 = vrot.lane.b32.xlu0 %v1889, 24
        %v1900 = vpop.permute.xlu0 %1899
        %v1902 = vsel %vm1574, %v1883, %v1892
        %vm1903 = vcmask 130048
        %v1904 = vsel %vm1903, %v1902, %v1896
        %vm1905 = vcmask 195584
        %v1906 = vsel %vm1905, %v1904, %v1900
        %v1907 = vpack.c.bf16 %v1906, %v1906
        %v1908 = vld [vmem:[%s852] sm:$0xf]
        %v1909 = vld [vmem:[%s852 + $0x4] sm:$0xf]
        %v1910 = vld [vmem:[%s852 + $0x8] sm:$0xf]
        %v1911 = vld [vmem:[%s852 + $0xc] sm:$0xf]
        %v1912 = vld [vmem:[%s1030] sm:$0x1]
        %v1914 = vperm.slane %v1912, 0
        %v1920 = vunpack.c.l.b16 %v1908
        %v1921 = vunpack.c.l.b16 %v1909
        %v1922 = vunpack.c.l.b16 %v1910
        %v1923 = vunpack.c.l.b16 %v1911
        %v1924 = vpack.c.b16 %v1921, %v1920
        %v1925 = vpack.c.b16 %v1923, %v1922
        %v1929 = vsel %vm1118, %v1907, 0
        %1931 = vmatpush.bf16.msra.mxu0 0
        %1932 = vmatpush.bf16.msra.mxu0 0
        %1933 = vmatpush.bf16.msra.mxu0 0
        %1934 = vmatpush.bf16.msra.mxu0 0
        %1935 = vmatpush.bf16.msra.mxu0 0
        %1936 = vmatpush.bf16.msra.mxu0 0
        %1937 = vmatpush.bf16.msra.mxu0 %v1925
        %1938 = vmatpush.bf16.msra.mxu0 %v1924
        %1939 = vmatmul.bf16.gmra.mxu0 %v1929
        %v1940 = vpop.f32.mrf.mxu0
        %v1941 = vadd.f32 %v1914, %v1940
        %v1942 = vpop.f32.mrf.mxu0
        %1943 = vdwg.mxu0
        %v1944 = vadd.f32 %v1095, %v1941
        %v1945 = vld [vmem:[%s1033] sm:$0x1]
        %v1946 = vld [vmem:[%s861] sm:$0x1]
        %v1947 = vsel %vm1118, %v1944, 0.0
        %1948 = vadd.xlane.f32.xlu0 %v1947
        %v1949 = vpop.xlane.xlu0 %1948
        %v1950 = vrcp.pop 32.0
        %v1951 = vmul.f32 32.0, %v1950
        %v1952 = vsub.f32 1.0, %v1951
        %v1953 = vmul.f32 %v1950, %v1952
        %v1954 = vadd.f32 %v1950, %v1953
        %vm1955 = vweird.f32 %v1950
        %v1956 = vsel %vm1955, %v1950, %v1954
        %v1957 = vmul.f32 %v1949, %v1956
        %v1958 = vsub.f32 %v1944, %v1957
        %v1959 = vmul.f32 %v1958, %v1958
        %v1960 = vsel %vm1118, %v1959, 0.0
        %1961 = vadd.xlane.f32.xlu0 %v1960
        %v1962 = vpop.xlane.xlu0 %1961
        %v1963 = vmul.f32 %v1962, %v1956
        %v1964 = vadd.f32 %v1963, 1e-12
        %v1965 = vrsqrt.pop %v1964
        %v1966 = vmul.f32 %v1965, %v1964
        %v1967 = vmul.f32 %v1966, %v1965
        %v1968 = vmul.f32 0.5, %v1967
        %v1969 = vsub.f32 1.5, %v1968
        %v1970 = vmul.f32 %v1965, %v1969
        %vm1971 = vweird.f32 %v1964
        %vm1972 = vweird.f32 %v1965
        %vm1973 = vmor %vm1971, %vm1972
        %v1974 = vsel %vm1973, %v1965, %v1970
        %v1975 = vmul.f32 %v1958, %v1974
        %v1977 = vperm.slane %v1945, 0
        %v1979 = vmul.f32 %v1975, %v1977
        %v1981 = vperm.slane %v1946, 0
        %v1983 = vadd.f32 %v1979, %v1981
        %v1984 = vpack.c.bf16 %v1983, %v1983
        %v1985 = vld [vmem:[%s871] sm:$0xf]
        %v1986 = vld [vmem:[%s871 + $0x4] sm:$0xf]
        %v1987 = vld [vmem:[%s871 + $0x8] sm:$0xf]
        %v1988 = vld [vmem:[%s871 + $0xc] sm:$0xf]
        %v1989 = vld [vmem:[%s1036] sm:$0x1]
        %v1991 = vperm.slane %v1989, 0
        %v1997 = vunpack.c.l.b16 %v1985
        %v1998 = vunpack.c.l.b16 %v1986
        %v1999 = vunpack.c.l.b16 %v1987
        %v2000 = vunpack.c.l.b16 %v1988
        %v2001 = vpack.c.b16 %v1998, %v1997
        %v2002 = vpack.c.b16 %v2000, %v1999
        %v2006 = vsel %vm1118, %v1984, 0
        %2008 = vmatpush.bf16.msra.mxu0 0
        %2009 = vmatpush.bf16.msra.mxu0 0
        %2010 = vmatpush.bf16.msra.mxu0 0
        %2011 = vmatpush.bf16.msra.mxu0 0
        %2012 = vmatpush.bf16.msra.mxu0 0
        %2013 = vmatpush.bf16.msra.mxu0 0
        %2014 = vmatpush.bf16.msra.mxu0 %v2002
        %2015 = vmatpush.bf16.msra.mxu0 %v2001
        %2016 = vmatmul.bf16.gmra.mxu0 %v2006
        %v2017 = vpop.f32.mrf.mxu0
        %v2018 = vadd.f32 %v1991, %v2017
        %v2019 = vpop.f32.mrf.mxu0
        %2020 = vdwg.mxu0
        %v2021 = vmul.f32 %v2018, 0.5
        %v2022 = vmul.f32 %v2018, 0.044715
        %v2023 = vmul.f32 %v2022, %v2018
        %v2024 = vmul.f32 %v2023, %v2018
        %v2025 = vadd.f32 %v2018, %v2024
        %v2026 = vmul.f32 %v2025, 0.7978846
        %v2027 = vtanh.pop %v2026
        %v2028 = vadd.f32 %v2027, 1.0
        %v2029 = vmul.f32 %v2021, %v2028
        %v2030 = vpack.c.bf16 %v2029, %v2029
        %v2031 = vld [vmem:[%s1041] sm:$0xf]
        %v2032 = vld [vmem:[%s1041 + $0x4] sm:$0xf]
        %v2033 = vld [vmem:[%s1041 + $0x8] sm:$0xf]
        %v2034 = vld [vmem:[%s1041 + $0xc] sm:$0xf]
        %v2035 = vld [vmem:[%s1041 + $0x10] sm:$0xf]
        %v2036 = vld [vmem:[%s1041 + $0x14] sm:$0xf]
        %v2037 = vld [vmem:[%s1041 + $0x18] sm:$0xf]
        %v2038 = vld [vmem:[%s1041 + $0x1c] sm:$0xf]
        %v2039 = vld [vmem:[%s1044] sm:$0x1]
        %v2041 = vperm.slane %v2039, 0
        %v2051 = vunpack.c.l.b16 %v2031
        %v2052 = vunpack.c.l.b16 %v2032
        %v2053 = vunpack.c.l.b16 %v2033
        %v2054 = vunpack.c.l.b16 %v2034
        %v2055 = vunpack.c.l.b16 %v2035
        %v2056 = vunpack.c.l.b16 %v2036
        %v2057 = vunpack.c.l.b16 %v2037
        %v2058 = vunpack.c.l.b16 %v2038
        %v2059 = vpack.c.b16 %v2052, %v2051
        %v2060 = vpack.c.b16 %v2054, %v2053
        %v2061 = vpack.c.b16 %v2056, %v2055
        %v2062 = vpack.c.b16 %v2058, %v2057
        %vm2067 = vcmask 523264
        %v2069 = vsel %vm2067, %v2030, 0
        %2071 = vmatpush.bf16.msra.mxu0 0
        %2072 = vmatpush.bf16.msra.mxu0 0
        %2073 = vmatpush.bf16.msra.mxu0 0
        %2074 = vmatpush.bf16.msra.mxu0 0
        %2075 = vmatpush.bf16.msra.mxu0 %v2062
        %2076 = vmatpush.bf16.msra.mxu0 %v2061
        %2077 = vmatpush.bf16.msra.mxu0 %v2060
        %2078 = vmatpush.bf16.msra.mxu0 %v2059
        %2079 = vmatmul.bf16.gmra.mxu0 %v2069
        %v2080 = vpop.f32.mrf.mxu0
        %v2081 = vadd.f32 %v2041, %v2080
        %v2082 = vpop.f32.mrf.mxu0
        %2083 = vdwg.mxu0
        %v2084 = vadd.f32 %v1983, %v2081
        %v2085 = vld [vmem:[%s1047] sm:$0x1]
        %v2086 = vld [vmem:[%s880] sm:$0x1]
        %v2087 = vsel %vm1118, %v2084, 0.0
        %2088 = vadd.xlane.f32.xlu0 %v2087
        %v2089 = vpop.xlane.xlu0 %2088
        %v2090 = vmul.f32 %v2089, %v1956
        %v2091 = vsub.f32 %v2084, %v2090
        %v2092 = vmul.f32 %v2091, %v2091
        %v2093 = vsel %vm1118, %v2092, 0.0
        %2094 = vadd.xlane.f32.xlu0 %v2093
        %v2095 = vpop.xlane.xlu0 %2094
        %v2096 = vmul.f32 %v2095, %v1956
        %v2097 = vadd.f32 %v2096, 1e-12
        %v2098 = vrsqrt.pop %v2097
        %v2099 = vmul.f32 %v2098, %v2097
        %v2100 = vmul.f32 %v2099, %v2098
        %v2101 = vmul.f32 0.5, %v2100
        %v2102 = vsub.f32 1.5, %v2101
        %v2103 = vmul.f32 %v2098, %v2102
        %vm2104 = vweird.f32 %v2097
        %vm2105 = vweird.f32 %v2098
        %vm2106 = vmor %vm2104, %vm2105
        %v2107 = vsel %vm2106, %v2098, %v2103
        %v2108 = vmul.f32 %v2091, %v2107
        %v2110 = vperm.slane %v2085, 0
        %v2112 = vmul.f32 %v2108, %v2110
        %v2114 = vperm.slane %v2086, 0
        %v2116 = vadd.f32 %v2112, %v2114
        %2117 = vst.msk [vmem:[%s1003] sm:$0xff] %vm1118, %v2116
        %s2118 = sand.u32 %s576, 1
        %s2119 = scalar_lea.sflag [#allocation4], %s2118
        %s2120 = sand.u32 %s576, 1
        %s2121 = smul.addr %s2120, 8
        %s2122 = scalar_lea.vmem [#allocation14], %s2121
        // Predicated region
        $region133: #{tpu_custom_call.1} parent=99 // pred_check
          %p2123 = pneg %p586
        $region134: #{tpu_custom_call.1} parent=99 // pred_check_branch
          %2125 = sbr.rel (%p2123) target = $region136
        $region135: #{tpu_custom_call.1} parent=99 // pred_region
          %2127 = vsyncadd %s2119, 0
          %s2128 = smul.addr %s50, 8
          %s2129 = scalar_lea.hbm %s20, %s2128
          %s2131 = sshll.u32 %s2122, 4
          %s2132 = int_to_ptr.vmem [resolvable:$true] %s2131
          %s2133 = sshll.u32 %s2129, 4
          %s2134 = int_to_ptr.hbm [resolvable:$true] %s2133
          %2136 = dma.vmem_to_hbm [thread:$0]  %s2132, 128, %s2134, %s2119
        $region136: #{tpu_custom_call.1} parent=99 // pred_fallthru
          _
      $region100: #{tpu_custom_call.1} parent=5 // pred_fallthru
        _
      %p2137 = scmp.le.s32.totalorder 2, %s41
      // Predicated region
      $region137: #{tpu_custom_call.1} parent=5 // pred_check
        %p2138 = pneg %p2137
      $region138: #{tpu_custom_call.1} parent=5 // pred_check_branch
        %2140 = sbr.rel (%p2138) target = $region140
      $region139: #{tpu_custom_call.1} parent=5 // pred_region
        %s2141 = ssub.s32 %s41, 2
        // Predicated region
        $region141: #{tpu_custom_call.1} parent=139 // pred_check
          %p2142 = pneg %p592
        $region142: #{tpu_custom_call.1} parent=139 // pred_check_branch
          %2144 = sbr.rel (%p2142) target = $region144
        $region143: #{tpu_custom_call.1} parent=139 // pred_region
          %s2145 = sand.u32 %s577, 1
          %s2146 = scalar_lea.sflag [#allocation4], %s2145
          %s2147 = sand.u32 %s577, 1
          %s2148 = smul.addr %s2147, 8
          %s2149 = scalar_lea.vmem [#allocation14], %s2148
          %2151 = dma.done %s2146, 128
        $region144: #{tpu_custom_call.1} parent=139 // pred_fallthru
          _
      $region140: #{tpu_custom_call.1} parent=5 // pred_fallthru
        _
    $region6: #{tpu_custom_call.1} parent=1 // loop_footer
      %s45 = sadd.s32 1, %s41
    $region7: #{tpu_custom_call.1} parent=1 // loop_footer_branch
      %40 = sbr.rel target = $region3
    $region8: #{tpu_custom_call.1} parent=1 // loop_exit
      _
    %2152 = vsyncpa [#allocation3], 1
    %s2153 = scalar_lea.sflag [#allocation3], 1
    %2154 = vsyncpa %s2153, 1
    %2155 = vsyncpa [#allocation6], 1
    %s2156 = scalar_lea.sflag [#allocation6], 1
    %2157 = vsyncpa %s2156, 1
    %2158 = vsyncpa [#allocation9], 1
    %s2159 = scalar_lea.sflag [#allocation9], 1
    %2160 = vsyncpa %s2159, 1
    %2161 = vsyncpa [#allocation12], 1
    %s2162 = scalar_lea.sflag [#allocation12], 1
    %2163 = vsyncpa %s2162, 1
    %2164 = vsyncpa [#allocation4], 1
    %s2165 = scalar_lea.sflag [#allocation4], 1
    %2166 = vsyncpa %s2165, 1

</llo_original>
